<compile_context>
chip_gen: v5e
topology: v5e:2x2
jax: 0.10.0
libtpu: 0.0.40
codegen_flags: <defaults>
</compile_context>

<pallas_src>
import math

import jax
import jax.numpy as jnp
from jax.experimental import pallas as pl
from jax.experimental.pallas import tpu as pltpu

# ----------------------- synthetic config -----------------------
B, S = 2, 8
N_EMBD = 64                                   # E
N_HEAD = 4
N_KV_HEADS = 2
HEAD_DIM = N_EMBD // N_HEAD                   # 16
N_REP = N_HEAD // N_KV_HEADS                  # 2
INTERMEDIATE = 128                            # gated-MLP hidden dim
Q_DIM = N_HEAD * HEAD_DIM                     # 64
KV_DIM = N_KV_HEADS * HEAD_DIM                # 32
QK_W = 2 * N_HEAD * HEAD_DIM                  # 128 (q|k slab width, lane-dense)
QKV_EXP_OUT = QK_W + KV_DIM                   # 160: [q(64)|k_expanded(64)|v(32)]
NORM_EPS = 1e-5
QK_NORM_EPS = 1.1920928955078125e-07          # torch.finfo(float32).eps


# ----------------------- fused Pallas kernel -----------------------
def sandwich_block_kernel(x_ref, n1_ref, n2_ref, n3_ref, n4_ref,
                          wqkv_ref, qkb_ref, wproj_ref, w13_ref, w2_ref,
                          cos_ref, sina_ref, sinb_ref, mask_ref, o_ref):
    f32 = jnp.float32
    bf16 = jnp.bfloat16
    x = x_ref[...].astype(f32)                                    # (R, E)

    def rms(h, w_ref):                                            # RMSNorm (f32)
        ms = jnp.mean(h * h, axis=-1, keepdims=True)
        return h * jax.lax.rsqrt(ms + NORM_EPS) * w_ref[...]

    def mm(a, w_ref):                                             # bf16 MXU, f32 acc
        return jnp.dot(a.astype(bf16), w_ref[...],
                       preferred_element_type=f32)

    # ---------------- attention branch ----------------
    h1 = rms(x, n1_ref)                                           # norm_1
    qkv = mm(h1, wqkv_ref)                                        # (R, 160)
    # TODO(synk): clip_qkv is None in the assumed config (no clamp applied).

    # q|k slab: one contiguous, lane-dense 128-lane slice (GQA K-expansion was
    # baked into the weight on the host).  qk_bias is pre-RoPE, per q/k head.
    qk = qkv[:, :QK_W] + qkb_ref[...]                             # (R, 128)
    v = qkv[:, QK_W:]                                             # (R, 32) un-expanded

    # RoPE on interleaved (even, odd) pairs via two XLU lane rotations; the pair
    # sign and parity selection are baked into the host-precomputed sin tables
    # (sina is nonzero only on even lanes = -sin, sinb only on odd lanes = +sin).
    qk = (qk * cos_ref[...]
          + pltpu.roll(qk, QK_W - 1, axis=1) * sina_ref[...]      # qk[lane+1]
          + pltpu.roll(qk, 1, axis=1) * sinb_ref[...])            # qk[lane-1]

    # Causal softmax attention, unrolled over the few tiny heads (all in VMEM).
    # mask_ref is an additive block-diagonal causal mask (0 / -1e30) so that a
    # single (R, R) score matmul handles every batch fused into this block.
    addmask = mask_ref[...]                                       # (R, R)
    scale = 1.0 / math.sqrt(HEAD_DIM)
    heads = []
    for h in range(N_HEAD):
        qs = qk[:, h * HEAD_DIM:(h + 1) * HEAD_DIM]               # (R, hd)
        ks = qk[:, Q_DIM + h * HEAD_DIM:Q_DIM + (h + 1) * HEAD_DIM]
        vs = v[:, (h // N_REP) * HEAD_DIM:(h // N_REP + 1) * HEAD_DIM]
        # per-head qk rms_norm (exact, folded into the head loop; no MXU pass)
        qs = qs * (jax.lax.rsqrt(jnp.mean(qs * qs, -1, keepdims=True)
                                 + QK_NORM_EPS) * scale)
        ks = ks * jax.lax.rsqrt(jnp.mean(ks * ks, -1, keepdims=True)
                                + QK_NORM_EPS)
        s = jax.lax.dot_general(qs.astype(bf16), ks.astype(bf16),
                                (((1,), (1,)), ((), ())),
                                preferred_element_type=f32) + addmask
        m = jnp.max(s, axis=-1, keepdims=True)
        p = jnp.exp(s - m)
        p = p * pl.reciprocal(jnp.sum(p, axis=-1, keepdims=True), approx=True)
        heads.append(jnp.dot(p.astype(bf16), vs.astype(bf16),
                             preferred_element_type=f32))
    y = jnp.concatenate(heads, axis=-1)                           # (R, E)

    t1 = mm(y, wproj_ref) + x                                     # proj + residual
    x2 = rms(t1, n2_ref)                                          # norm_2 (post-add)

    # ---------------- MLP branch ----------------
    h3 = rms(x2, n3_ref)                                          # norm_3
    gu = mm(h3, w13_ref)                                          # (R, 2*I) fused w1|w3
    g = gu[:, :INTERMEDIATE]
    u = gu[:, INTERMEDIATE:]
    a = (g * jax.nn.sigmoid(g)) * u                               # SwiGLU
    t2 = mm(a, w2_ref) + x2                                       # down proj + residual
    o_ref[...] = rms(t2, n4_ref).astype(o_ref.dtype)              # norm_4 (post-add)


# ----------------------- host-side (one-time) input prep -----------------------
def prepare_inputs(params, freqs_cis, *, batch_grid=1):
    """One-time host prep: bf16 weights, GQA-expanded wqkv, lane-dense RoPE
    tables with parity/sign baked in, block-diagonal causal mask."""
    assert B % batch_grid == 0
    nb = B // batch_grid                      # batches fused per grid step
    rows = nb * S

    f32 = jnp.float32
    # GQA K-expansion baked into QKV weight columns: [q | k_expanded | v].
    wq = params["wqkv"][:, :Q_DIM]
    wk = params["wqkv"][:, Q_DIM:Q_DIM + KV_DIM]
    wv = params["wqkv"][:, Q_DIM + KV_DIM:]
    wk_exp = jnp.concatenate(
        [wk[:, (h // N_REP) * HEAD_DIM:(h // N_REP + 1) * HEAD_DIM]
         for h in range(N_HEAD)], axis=-1)
    wqkv = jnp.concatenate([wq, wk_exp, wv], axis=-1).astype(jnp.bfloat16)

    # Lane-dense RoPE tables, (rows, 128).  cos repeated per (even, odd) pair;
    # sina carries -sin on even lanes (0 on odd), sinb carries +sin on odd lanes.
    cos = freqs_cis[:, 0, :, 0].astype(f32)                       # (S, hd/2)
    sin = freqs_cis[:, 0, :, 1].astype(f32)
    cos_blk = jnp.repeat(cos, 2, axis=-1)                         # (S, hd)
    sin_blk = jnp.repeat(sin, 2, axis=-1)
    even_neg = jnp.tile(jnp.array([-1.0, 0.0], f32), HEAD_DIM // 2)
    odd_pos = jnp.tile(jnp.array([0.0, 1.0], f32), HEAD_DIM // 2)
    cos_t = jnp.tile(cos_blk, (nb, 2 * N_HEAD))                   # (rows, 128)
    sina_t = jnp.tile(sin_blk * even_neg, (nb, 2 * N_HEAD))
    sinb_t = jnp.tile(sin_blk * odd_pos, (nb, 2 * N_HEAD))

    # Block-diagonal causal additive mask over the rows fused into one block.
    r = jnp.arange(rows)
    allowed = ((r[:, None] // S == r[None, :] // S)
               & (r[None, :] % S <= r[:, None] % S))
    addmask = jnp.where(allowed, 0.0, -1e30).astype(f32)

    return {
        "norm1_w": params["norm1_w"].reshape(1, -1).astype(f32),
        "norm2_w": params["norm2_w"].reshape(1, -1).astype(f32),
        "norm3_w": params["norm3_w"].reshape(1, -1).astype(f32),
        "norm4_w": params["norm4_w"].reshape(1, -1).astype(f32),
        "wqkv": wqkv,
        "qk_bias": params["qk_bias"].reshape(1, QK_W).astype(f32),
        "wproj": params["wproj"].astype(jnp.bfloat16),
        "w13": params["w13"].astype(jnp.bfloat16),
        "w2": params["w2"].astype(jnp.bfloat16),
        "cos": cos_t, "sina": sina_t, "sinb": sinb_t, "mask": addmask,
    }


# ----------------------- wrapper (one pallas_call) -----------------------
def sandwich_forward(x, prep, *, batch_grid=1):
    """x: (B, S, E) float32.  prep: output of prepare_inputs (same batch_grid).
    batch_grid=1 fuses the whole batch into one grid step (best on single-TC
    v5e/v6e); on v7x use batch_grid=B to shard across the two TensorCores."""
    Bb, Ss, E = x.shape
    rows = (Bb // batch_grid) * Ss
    x2d = x.reshape(Bb * Ss, E)

    def fixed(arr):
        n = arr.ndim
        return pl.BlockSpec(arr.shape, lambda b, _n=n: (0,) * _n)

    operands = (x2d, prep["norm1_w"], prep["norm2_w"], prep["norm3_w"],
                prep["norm4_w"], prep["wqkv"], prep["qk_bias"], prep["wproj"],
                prep["w13"], prep["w2"], prep["cos"], prep["sina"],
                prep["sinb"], prep["mask"])

    out2d = pl.pallas_call(
        sandwich_block_kernel,
        out_shape=jax.ShapeDtypeStruct((Bb * Ss, E), x.dtype),
        grid=(batch_grid,),
        in_specs=[pl.BlockSpec((rows, E), lambda b: (b, 0))]      # this block's rows
                 + [fixed(a) for a in operands[1:]],
        out_specs=pl.BlockSpec((rows, E), lambda b: (b, 0)),
        compiler_params=pltpu.CompilerParams(
            dimension_semantics=("parallel",)),                   # 2 TCs on v7x
    )(*operands)
    return out2d.reshape(Bb, Ss, E)


# ----------------------- pure-JAX reference (verification) -----------------------
def reference_forward(x, freqs_cis, params):
    def rms(h, w, eps):
        return h * jax.lax.rsqrt(jnp.mean(h * h, -1, keepdims=True) + eps) * w

    w1 = params["w13"][:, :INTERMEDIATE]
    w3 = params["w13"][:, INTERMEDIATE:]

    h = rms(x, params["norm1_w"], NORM_EPS)
    qkv = jnp.einsum("bse,ef->bsf", h, params["wqkv"])
    q, k, v = jnp.split(qkv, [N_EMBD, N_EMBD + KV_DIM], axis=-1)
    q = q.reshape(B, S, N_HEAD, HEAD_DIM)
    k = jnp.repeat(k.reshape(B, S, N_KV_HEADS, HEAD_DIM), N_REP, axis=2)
    v = jnp.repeat(v.reshape(B, S, N_KV_HEADS, HEAD_DIM), N_REP, axis=2)
    q = q + params["qk_bias"][0]
    k = k + params["qk_bias"][1]
    qk = jnp.concatenate([q, k], axis=2).reshape(B, S, 2 * N_HEAD, HEAD_DIM // 2, 2)
    cos, sin = freqs_cis[..., 0], freqs_cis[..., 1]
    re = qk[..., 0] * cos - qk[..., 1] * sin
    ro = qk[..., 1] * cos + qk[..., 0] * sin
    rot = jnp.stack([re, ro], -1).reshape(B, S, 2 * N_HEAD, HEAD_DIM)
    q, k = rot[:, :, :N_HEAD], rot[:, :, N_HEAD:]
    qn = lambda t: t * jax.lax.rsqrt(jnp.mean(t * t, -1, keepdims=True) + QK_NORM_EPS)
    q, k = qn(q), qn(k)
    qh, kh, vh = (t.transpose(0, 2, 1, 3) for t in (q, k, v))
    s = jnp.einsum("bhqd,bhkd->bhqk", qh, kh) / math.sqrt(HEAD_DIM)
    mask = jnp.tril(jnp.ones((S, S), bool))
    s = jnp.where(mask, s, -1e30)
    p = jax.nn.softmax(s, axis=-1)
    y = jnp.einsum("bhqk,bhkd->bhqd", p, vh).transpose(0, 2, 1, 3).reshape(B, S, N_EMBD)
    t1 = jnp.einsum("bse,ef->bsf", y, params["wproj"]) + x
    x2 = rms(t1, params["norm2_w"], NORM_EPS)
    h3 = rms(x2, params["norm3_w"], NORM_EPS)
    g = jnp.einsum("bse,ei->bsi", h3, w1)
    u = jnp.einsum("bse,ei->bsi", h3, w3)
    t2 = jnp.einsum("bsi,ie->bse", g * jax.nn.sigmoid(g) * u, params["w2"]) + x2
    return rms(t2, params["norm4_w"], NORM_EPS)


# ----------------------- main -----------------------
if __name__ == "__main__":
    key = jax.random.PRNGKey(0)
    keys = jax.random.split(key, 12)
    QKV_OUT = (N_HEAD + 2 * N_KV_HEADS) * HEAD_DIM
    params = {
        "norm1_w": 1.0 + 0.05 * jax.random.normal(keys[0], (N_EMBD,), jnp.float32),
        "norm2_w": 1.0 + 0.05 * jax.random.normal(keys[1], (N_EMBD,), jnp.float32),
        "norm3_w": 1.0 + 0.05 * jax.random.normal(keys[2], (N_EMBD,), jnp.float32),
        "norm4_w": 1.0 + 0.05 * jax.random.normal(keys[3], (N_EMBD,), jnp.float32),
        "wqkv":    0.05 * jax.random.normal(keys[4], (N_EMBD, QKV_OUT), jnp.float32),
        "qk_bias": 0.05 * jax.random.normal(keys[5], (2, 1, N_HEAD, HEAD_DIM), jnp.float32),
        "wproj":   0.05 * jax.random.normal(keys[6], (N_EMBD, N_EMBD), jnp.float32),
        "w13":     0.05 * jax.random.normal(keys[7], (N_EMBD, 2 * INTERMEDIATE), jnp.float32),
        "w2":      0.05 * jax.random.normal(keys[8], (INTERMEDIATE, N_EMBD), jnp.float32),
    }
    x = jax.random.normal(keys[9], (B, S, N_EMBD), jnp.float32)

    # freqs_cis in torch-broadcastable layout (S, 1, head_dim//2, 2) = (cos, sin)
    pos = jnp.arange(S, dtype=jnp.float32)
    inv_freq = 1.0 / (10000.0 ** (jnp.arange(0, HEAD_DIM, 2, dtype=jnp.float32) / HEAD_DIM))
    ang = pos[:, None] * inv_freq[None, :]
    freqs_cis = jnp.stack([jnp.cos(ang), jnp.sin(ang)], axis=-1)[:, None]   # (S,1,hd/2,2)

    # One-time host prep (bf16 weights, GQA-expanded wqkv, RoPE tables, mask).
    # batch_grid=1: whole batch fused per grid step (single-TC v5e/v6e);
    # on v7x use batch_grid=B to shard the batch axis across the two TCs.
    prep = prepare_inputs(params, freqs_cis, batch_grid=1)
    fwd = jax.jit(sandwich_forward, static_argnames=("batch_grid",))
    out = fwd(x, prep, batch_grid=1)
    out = jax.block_until_ready(out)

    ref = reference_forward(x, freqs_cis, params)
    assert out.shape == (B, S, N_EMBD), out.shape
    max_err = float(jnp.max(jnp.abs(out - ref)))
    assert max_err < 3e-2, f"max abs error too large: {max_err}"
    print("KERNEL_OK")
</pallas_src>

<mosaic_0001>
module attributes {stable_mosaic.version = 11 : i64} {
  func.func @sandwich_block_kernel(%arg0: i32, %arg1: memref<16x64xf32, #tpu.memory_space<vmem>>, %arg2: memref<1x64xf32, #tpu.memory_space<vmem>>, %arg3: memref<1x64xf32, #tpu.memory_space<vmem>>, %arg4: memref<1x64xf32, #tpu.memory_space<vmem>>, %arg5: memref<1x64xf32, #tpu.memory_space<vmem>>, %arg6: memref<64x160xbf16, #tpu.memory_space<vmem>>, %arg7: memref<1x128xf32, #tpu.memory_space<vmem>>, %arg8: memref<64x64xbf16, #tpu.memory_space<vmem>>, %arg9: memref<64x256xbf16, #tpu.memory_space<vmem>>, %arg10: memref<128x64xbf16, #tpu.memory_space<vmem>>, %arg11: memref<16x128xf32, #tpu.memory_space<vmem>>, %arg12: memref<16x128xf32, #tpu.memory_space<vmem>>, %arg13: memref<16x128xf32, #tpu.memory_space<vmem>>, %arg14: memref<16x16xf32, #tpu.memory_space<vmem>>, %arg15: memref<16x64xf32, #tpu.memory_space<vmem>>) attributes {dimension_semantics = [#tpu.dimension_semantics<parallel>], iteration_bounds = array<i64: 1>, scalar_prefetch = 0 : i64, scratch_operands = 0 : i64, tpu.core_type = #tpu.core_type<tc>, window_params = [{transform_indices = @transform_0, window_bounds = array<i64: 16, 64>}, {pipeline_mode = #tpu.pipeline_mode<synchronous>, transform_indices = @transform_1, window_bounds = array<i64: 1, 64>}, {pipeline_mode = #tpu.pipeline_mode<synchronous>, transform_indices = @transform_2, window_bounds = array<i64: 1, 64>}, {pipeline_mode = #tpu.pipeline_mode<synchronous>, transform_indices = @transform_3, window_bounds = array<i64: 1, 64>}, {pipeline_mode = #tpu.pipeline_mode<synchronous>, transform_indices = @transform_4, window_bounds = array<i64: 1, 64>}, {pipeline_mode = #tpu.pipeline_mode<synchronous>, transform_indices = @transform_5, window_bounds = array<i64: 64, 160>}, {pipeline_mode = #tpu.pipeline_mode<synchronous>, transform_indices = @transform_6, window_bounds = array<i64: 1, 128>}, {pipeline_mode = #tpu.pipeline_mode<synchronous>, transform_indices = @transform_7, window_bounds = array<i64: 64, 64>}, {pipeline_mode = #tpu.pipeline_mode<synchronous>, transform_indices = @transform_8, window_bounds = array<i64: 64, 256>}, {pipeline_mode = #tpu.pipeline_mode<synchronous>, transform_indices = @transform_9, window_bounds = array<i64: 128, 64>}, {pipeline_mode = #tpu.pipeline_mode<synchronous>, transform_indices = @transform_10, window_bounds = array<i64: 16, 128>}, {pipeline_mode = #tpu.pipeline_mode<synchronous>, transform_indices = @transform_11, window_bounds = array<i64: 16, 128>}, {pipeline_mode = #tpu.pipeline_mode<synchronous>, transform_indices = @transform_12, window_bounds = array<i64: 16, 128>}, {pipeline_mode = #tpu.pipeline_mode<synchronous>, transform_indices = @transform_13, window_bounds = array<i64: 16, 16>}, {transform_indices = @transform_14, window_bounds = array<i64: 16, 64>}]} {
    %c0 = arith.constant 0 : index
    %c0_0 = arith.constant 0 : index
    %0 = vector.load %arg1[%c0, %c0_0] : memref<16x64xf32, #tpu.memory_space<vmem>>, vector<16x64xf32>
    %1 = arith.mulf %0, %0 : vector<16x64xf32>
    %cst = arith.constant dense<0.000000e+00> : vector<16xf32>
    %2 = vector.multi_reduction <add>, %1, %cst [1] : vector<16x64xf32> to vector<16xf32>
    %3 = vector.shape_cast %2 : vector<16xf32> to vector<16x1xf32>
    %cst_1 = arith.constant 6.400000e+01 : f32
    %4 = vector.broadcast %cst_1 : f32 to vector<16x1xf32>
    %5 = arith.divf %3, %4 : vector<16x1xf32>
    %cst_2 = arith.constant 9.99999974E-6 : f32
    %6 = vector.broadcast %cst_2 : f32 to vector<16x1xf32>
    %7 = arith.addf %5, %6 : vector<16x1xf32>
    %8 = math.rsqrt %7 : vector<16x1xf32>
    %9 = vector.broadcast %8 : vector<16x1xf32> to vector<16x64xf32>
    %10 = arith.mulf %0, %9 : vector<16x64xf32>
    %c0_3 = arith.constant 0 : index
    %c0_4 = arith.constant 0 : index
    %11 = vector.load %arg2[%c0_3, %c0_4] : memref<1x64xf32, #tpu.memory_space<vmem>>, vector<1x64xf32>
    %12 = vector.broadcast %11 : vector<1x64xf32> to vector<16x64xf32>
    %13 = arith.mulf %10, %12 : vector<16x64xf32>
    %14 = arith.truncf %13 : vector<16x64xf32> to vector<16x64xbf16>
    %c0_5 = arith.constant 0 : index
    %c0_6 = arith.constant 0 : index
    %15 = vector.load %arg6[%c0_5, %c0_6] : memref<64x160xbf16, #tpu.memory_space<vmem>>, vector<64x160xbf16>
    %cst_7 = arith.constant dense<0.000000e+00> : vector<16x160xf32>
    %16 = tpu.matmul %14, %15, %cst_7 {dimension_numbers = #tpu.dot_dimension_numbers<[1], [0], [0], [1], [0, 0, 1, 1], [], []>} : vector<16x64xbf16>, vector<64x160xbf16>, vector<16x160xf32> -> vector<16x160xf32>
    %17 = vector.extract_strided_slice %16 {offsets = [0, 0], sizes = [16, 128], strides = [1, 1]} : vector<16x160xf32> to vector<16x128xf32>
    %c0_8 = arith.constant 0 : index
    %c0_9 = arith.constant 0 : index
    %18 = vector.load %arg7[%c0_8, %c0_9] : memref<1x128xf32, #tpu.memory_space<vmem>>, vector<1x128xf32>
    %19 = vector.broadcast %18 : vector<1x128xf32> to vector<16x128xf32>
    %20 = arith.addf %17, %19 : vector<16x128xf32>
    %21 = vector.extract_strided_slice %16 {offsets = [0, 128], sizes = [16, 32], strides = [1, 1]} : vector<16x160xf32> to vector<16x32xf32>
    %c0_10 = arith.constant 0 : index
    %c0_11 = arith.constant 0 : index
    %22 = vector.load %arg11[%c0_10, %c0_11] : memref<16x128xf32, #tpu.memory_space<vmem>>, vector<16x128xf32>
    %23 = arith.mulf %20, %22 : vector<16x128xf32>
    %c127_i32 = arith.constant 127 : i32
    %24 = tpu.dynamic_rotate %20 by %c127_i32 dim 1 : vector<16x128xf32>, i32 -> vector<16x128xf32>
    %c0_12 = arith.constant 0 : index
    %c0_13 = arith.constant 0 : index
    %25 = vector.load %arg12[%c0_12, %c0_13] : memref<16x128xf32, #tpu.memory_space<vmem>>, vector<16x128xf32>
    %26 = arith.mulf %24, %25 : vector<16x128xf32>
    %27 = arith.addf %23, %26 : vector<16x128xf32>
    %c1_i32 = arith.constant 1 : i32
    %28 = tpu.dynamic_rotate %20 by %c1_i32 dim 1 : vector<16x128xf32>, i32 -> vector<16x128xf32>
    %c0_14 = arith.constant 0 : index
    %c0_15 = arith.constant 0 : index
    %29 = vector.load %arg13[%c0_14, %c0_15] : memref<16x128xf32, #tpu.memory_space<vmem>>, vector<16x128xf32>
    %30 = arith.mulf %28, %29 : vector<16x128xf32>
    %31 = arith.addf %27, %30 : vector<16x128xf32>
    %c0_16 = arith.constant 0 : index
    %c0_17 = arith.constant 0 : index
    %32 = vector.load %arg14[%c0_16, %c0_17] : memref<16x16xf32, #tpu.memory_space<vmem>>, vector<16x16xf32>
    %33 = vector.extract_strided_slice %31 {offsets = [0, 0], sizes = [16, 16], strides = [1, 1]} : vector<16x128xf32> to vector<16x16xf32>
    %34 = vector.extract_strided_slice %31 {offsets = [0, 64], sizes = [16, 16], strides = [1, 1]} : vector<16x128xf32> to vector<16x16xf32>
    %35 = vector.extract_strided_slice %21 {offsets = [0, 0], sizes = [16, 16], strides = [1, 1]} : vector<16x32xf32> to vector<16x16xf32>
    %36 = arith.mulf %33, %33 : vector<16x16xf32>
    %cst_18 = arith.constant dense<0.000000e+00> : vector<16xf32>
    %37 = vector.multi_reduction <add>, %36, %cst_18 [1] : vector<16x16xf32> to vector<16xf32>
    %38 = vector.shape_cast %37 : vector<16xf32> to vector<16x1xf32>
    %cst_19 = arith.constant 1.600000e+01 : f32
    %39 = vector.broadcast %cst_19 : f32 to vector<16x1xf32>
    %40 = arith.divf %38, %39 : vector<16x1xf32>
    %cst_20 = arith.constant 1.1920929E-7 : f32
    %41 = vector.broadcast %cst_20 : f32 to vector<16x1xf32>
    %42 = arith.addf %40, %41 : vector<16x1xf32>
    %43 = math.rsqrt %42 : vector<16x1xf32>
    %cst_21 = arith.constant 2.500000e-01 : f32
    %44 = vector.broadcast %cst_21 : f32 to vector<16x1xf32>
    %45 = arith.mulf %43, %44 : vector<16x1xf32>
    %46 = vector.broadcast %45 : vector<16x1xf32> to vector<16x16xf32>
    %47 = arith.mulf %33, %46 : vector<16x16xf32>
    %48 = arith.mulf %34, %34 : vector<16x16xf32>
    %cst_22 = arith.constant dense<0.000000e+00> : vector<16xf32>
    %49 = vector.multi_reduction <add>, %48, %cst_22 [1] : vector<16x16xf32> to vector<16xf32>
    %50 = vector.shape_cast %49 : vector<16xf32> to vector<16x1xf32>
    %cst_23 = arith.constant 1.600000e+01 : f32
    %51 = vector.broadcast %cst_23 : f32 to vector<16x1xf32>
    %52 = arith.divf %50, %51 : vector<16x1xf32>
    %cst_24 = arith.constant 1.1920929E-7 : f32
    %53 = vector.broadcast %cst_24 : f32 to vector<16x1xf32>
    %54 = arith.addf %52, %53 : vector<16x1xf32>
    %55 = math.rsqrt %54 : vector<16x1xf32>
    %56 = vector.broadcast %55 : vector<16x1xf32> to vector<16x16xf32>
    %57 = arith.mulf %34, %56 : vector<16x16xf32>
    %58 = arith.truncf %47 : vector<16x16xf32> to vector<16x16xbf16>
    %59 = arith.truncf %57 : vector<16x16xf32> to vector<16x16xbf16>
    %cst_25 = arith.constant dense<0.000000e+00> : vector<16x16xf32>
    %60 = tpu.matmul %58, %59, %cst_25 {dimension_numbers = #tpu.dot_dimension_numbers<[1], [1], [0], [0], [0, 0, 1, 0], [], []>} : vector<16x16xbf16>, vector<16x16xbf16>, vector<16x16xf32> -> vector<16x16xf32>
    %61 = arith.addf %60, %32 : vector<16x16xf32>
    %cst_26 = arith.constant dense<0xFF800000> : vector<16xf32>
    %62 = vector.multi_reduction <maximumf>, %61, %cst_26 [1] : vector<16x16xf32> to vector<16xf32>
    %63 = vector.shape_cast %62 : vector<16xf32> to vector<16x1xf32>
    %64 = vector.broadcast %63 : vector<16x1xf32> to vector<16x16xf32>
    %65 = arith.subf %61, %64 : vector<16x16xf32>
    %66 = math.exp %65 : vector<16x16xf32>
    %cst_27 = arith.constant dense<0.000000e+00> : vector<16xf32>
    %67 = vector.multi_reduction <add>, %66, %cst_27 [1] : vector<16x16xf32> to vector<16xf32>
    %68 = vector.shape_cast %67 : vector<16xf32> to vector<16x1xf32>
    %69 = tpu.reciprocal %68 {approx = true} : vector<16x1xf32> -> vector<16x1xf32>
    %70 = vector.broadcast %69 : vector<16x1xf32> to vector<16x16xf32>
    %71 = arith.mulf %66, %70 : vector<16x16xf32>
    %72 = arith.truncf %71 : vector<16x16xf32> to vector<16x16xbf16>
    %73 = arith.truncf %35 : vector<16x16xf32> to vector<16x16xbf16>
    %cst_28 = arith.constant dense<0.000000e+00> : vector<16x16xf32>
    %74 = tpu.matmul %72, %73, %cst_28 {dimension_numbers = #tpu.dot_dimension_numbers<[1], [0], [0], [1], [0, 0, 1, 1], [], []>} : vector<16x16xbf16>, vector<16x16xbf16>, vector<16x16xf32> -> vector<16x16xf32>
    %75 = vector.extract_strided_slice %31 {offsets = [0, 16], sizes = [16, 16], strides = [1, 1]} : vector<16x128xf32> to vector<16x16xf32>
    %76 = vector.extract_strided_slice %31 {offsets = [0, 80], sizes = [16, 16], strides = [1, 1]} : vector<16x128xf32> to vector<16x16xf32>
    %77 = vector.extract_strided_slice %21 {offsets = [0, 0], sizes = [16, 16], strides = [1, 1]} : vector<16x32xf32> to vector<16x16xf32>
    %78 = arith.mulf %75, %75 : vector<16x16xf32>
    %cst_29 = arith.constant dense<0.000000e+00> : vector<16xf32>
    %79 = vector.multi_reduction <add>, %78, %cst_29 [1] : vector<16x16xf32> to vector<16xf32>
    %80 = vector.shape_cast %79 : vector<16xf32> to vector<16x1xf32>
    %cst_30 = arith.constant 1.600000e+01 : f32
    %81 = vector.broadcast %cst_30 : f32 to vector<16x1xf32>
    %82 = arith.divf %80, %81 : vector<16x1xf32>
    %cst_31 = arith.constant 1.1920929E-7 : f32
    %83 = vector.broadcast %cst_31 : f32 to vector<16x1xf32>
    %84 = arith.addf %82, %83 : vector<16x1xf32>
    %85 = math.rsqrt %84 : vector<16x1xf32>
    %cst_32 = arith.constant 2.500000e-01 : f32
    %86 = vector.broadcast %cst_32 : f32 to vector<16x1xf32>
    %87 = arith.mulf %85, %86 : vector<16x1xf32>
    %88 = vector.broadcast %87 : vector<16x1xf32> to vector<16x16xf32>
    %89 = arith.mulf %75, %88 : vector<16x16xf32>
    %90 = arith.mulf %76, %76 : vector<16x16xf32>
    %cst_33 = arith.constant dense<0.000000e+00> : vector<16xf32>
    %91 = vector.multi_reduction <add>, %90, %cst_33 [1] : vector<16x16xf32> to vector<16xf32>
    %92 = vector.shape_cast %91 : vector<16xf32> to vector<16x1xf32>
    %cst_34 = arith.constant 1.600000e+01 : f32
    %93 = vector.broadcast %cst_34 : f32 to vector<16x1xf32>
    %94 = arith.divf %92, %93 : vector<16x1xf32>
    %cst_35 = arith.constant 1.1920929E-7 : f32
    %95 = vector.broadcast %cst_35 : f32 to vector<16x1xf32>
    %96 = arith.addf %94, %95 : vector<16x1xf32>
    %97 = math.rsqrt %96 : vector<16x1xf32>
    %98 = vector.broadcast %97 : vector<16x1xf32> to vector<16x16xf32>
    %99 = arith.mulf %76, %98 : vector<16x16xf32>
    %100 = arith.truncf %89 : vector<16x16xf32> to vector<16x16xbf16>
    %101 = arith.truncf %99 : vector<16x16xf32> to vector<16x16xbf16>
    %cst_36 = arith.constant dense<0.000000e+00> : vector<16x16xf32>
    %102 = tpu.matmul %100, %101, %cst_36 {dimension_numbers = #tpu.dot_dimension_numbers<[1], [1], [0], [0], [0, 0, 1, 0], [], []>} : vector<16x16xbf16>, vector<16x16xbf16>, vector<16x16xf32> -> vector<16x16xf32>
    %103 = arith.addf %102, %32 : vector<16x16xf32>
    %cst_37 = arith.constant dense<0xFF800000> : vector<16xf32>
    %104 = vector.multi_reduction <maximumf>, %103, %cst_37 [1] : vector<16x16xf32> to vector<16xf32>
    %105 = vector.shape_cast %104 : vector<16xf32> to vector<16x1xf32>
    %106 = vector.broadcast %105 : vector<16x1xf32> to vector<16x16xf32>
    %107 = arith.subf %103, %106 : vector<16x16xf32>
    %108 = math.exp %107 : vector<16x16xf32>
    %cst_38 = arith.constant dense<0.000000e+00> : vector<16xf32>
    %109 = vector.multi_reduction <add>, %108, %cst_38 [1] : vector<16x16xf32> to vector<16xf32>
    %110 = vector.shape_cast %109 : vector<16xf32> to vector<16x1xf32>
    %111 = tpu.reciprocal %110 {approx = true} : vector<16x1xf32> -> vector<16x1xf32>
    %112 = vector.broadcast %111 : vector<16x1xf32> to vector<16x16xf32>
    %113 = arith.mulf %108, %112 : vector<16x16xf32>
    %114 = arith.truncf %113 : vector<16x16xf32> to vector<16x16xbf16>
    %115 = arith.truncf %77 : vector<16x16xf32> to vector<16x16xbf16>
    %cst_39 = arith.constant dense<0.000000e+00> : vector<16x16xf32>
    %116 = tpu.matmul %114, %115, %cst_39 {dimension_numbers = #tpu.dot_dimension_numbers<[1], [0], [0], [1], [0, 0, 1, 1], [], []>} : vector<16x16xbf16>, vector<16x16xbf16>, vector<16x16xf32> -> vector<16x16xf32>
    %117 = vector.extract_strided_slice %31 {offsets = [0, 32], sizes = [16, 16], strides = [1, 1]} : vector<16x128xf32> to vector<16x16xf32>
    %118 = vector.extract_strided_slice %31 {offsets = [0, 96], sizes = [16, 16], strides = [1, 1]} : vector<16x128xf32> to vector<16x16xf32>
    %119 = vector.extract_strided_slice %21 {offsets = [0, 16], sizes = [16, 16], strides = [1, 1]} : vector<16x32xf32> to vector<16x16xf32>
    %120 = arith.mulf %117, %117 : vector<16x16xf32>
    %cst_40 = arith.constant dense<0.000000e+00> : vector<16xf32>
    %121 = vector.multi_reduction <add>, %120, %cst_40 [1] : vector<16x16xf32> to vector<16xf32>
    %122 = vector.shape_cast %121 : vector<16xf32> to vector<16x1xf32>
    %cst_41 = arith.constant 1.600000e+01 : f32
    %123 = vector.broadcast %cst_41 : f32 to vector<16x1xf32>
    %124 = arith.divf %122, %123 : vector<16x1xf32>
    %cst_42 = arith.constant 1.1920929E-7 : f32
    %125 = vector.broadcast %cst_42 : f32 to vector<16x1xf32>
    %126 = arith.addf %124, %125 : vector<16x1xf32>
    %127 = math.rsqrt %126 : vector<16x1xf32>
    %cst_43 = arith.constant 2.500000e-01 : f32
    %128 = vector.broadcast %cst_43 : f32 to vector<16x1xf32>
    %129 = arith.mulf %127, %128 : vector<16x1xf32>
    %130 = vector.broadcast %129 : vector<16x1xf32> to vector<16x16xf32>
    %131 = arith.mulf %117, %130 : vector<16x16xf32>
    %132 = arith.mulf %118, %118 : vector<16x16xf32>
    %cst_44 = arith.constant dense<0.000000e+00> : vector<16xf32>
    %133 = vector.multi_reduction <add>, %132, %cst_44 [1] : vector<16x16xf32> to vector<16xf32>
    %134 = vector.shape_cast %133 : vector<16xf32> to vector<16x1xf32>
    %cst_45 = arith.constant 1.600000e+01 : f32
    %135 = vector.broadcast %cst_45 : f32 to vector<16x1xf32>
    %136 = arith.divf %134, %135 : vector<16x1xf32>
    %cst_46 = arith.constant 1.1920929E-7 : f32
    %137 = vector.broadcast %cst_46 : f32 to vector<16x1xf32>
    %138 = arith.addf %136, %137 : vector<16x1xf32>
    %139 = math.rsqrt %138 : vector<16x1xf32>
    %140 = vector.broadcast %139 : vector<16x1xf32> to vector<16x16xf32>
    %141 = arith.mulf %118, %140 : vector<16x16xf32>
    %142 = arith.truncf %131 : vector<16x16xf32> to vector<16x16xbf16>
    %143 = arith.truncf %141 : vector<16x16xf32> to vector<16x16xbf16>
    %cst_47 = arith.constant dense<0.000000e+00> : vector<16x16xf32>
    %144 = tpu.matmul %142, %143, %cst_47 {dimension_numbers = #tpu.dot_dimension_numbers<[1], [1], [0], [0], [0, 0, 1, 0], [], []>} : vector<16x16xbf16>, vector<16x16xbf16>, vector<16x16xf32> -> vector<16x16xf32>
    %145 = arith.addf %144, %32 : vector<16x16xf32>
    %cst_48 = arith.constant dense<0xFF800000> : vector<16xf32>
    %146 = vector.multi_reduction <maximumf>, %145, %cst_48 [1] : vector<16x16xf32> to vector<16xf32>
    %147 = vector.shape_cast %146 : vector<16xf32> to vector<16x1xf32>
    %148 = vector.broadcast %147 : vector<16x1xf32> to vector<16x16xf32>
    %149 = arith.subf %145, %148 : vector<16x16xf32>
    %150 = math.exp %149 : vector<16x16xf32>
    %cst_49 = arith.constant dense<0.000000e+00> : vector<16xf32>
    %151 = vector.multi_reduction <add>, %150, %cst_49 [1] : vector<16x16xf32> to vector<16xf32>
    %152 = vector.shape_cast %151 : vector<16xf32> to vector<16x1xf32>
    %153 = tpu.reciprocal %152 {approx = true} : vector<16x1xf32> -> vector<16x1xf32>
    %154 = vector.broadcast %153 : vector<16x1xf32> to vector<16x16xf32>
    %155 = arith.mulf %150, %154 : vector<16x16xf32>
    %156 = arith.truncf %155 : vector<16x16xf32> to vector<16x16xbf16>
    %157 = arith.truncf %119 : vector<16x16xf32> to vector<16x16xbf16>
    %cst_50 = arith.constant dense<0.000000e+00> : vector<16x16xf32>
    %158 = tpu.matmul %156, %157, %cst_50 {dimension_numbers = #tpu.dot_dimension_numbers<[1], [0], [0], [1], [0, 0, 1, 1], [], []>} : vector<16x16xbf16>, vector<16x16xbf16>, vector<16x16xf32> -> vector<16x16xf32>
    %159 = vector.extract_strided_slice %31 {offsets = [0, 48], sizes = [16, 16], strides = [1, 1]} : vector<16x128xf32> to vector<16x16xf32>
    %160 = vector.extract_strided_slice %31 {offsets = [0, 112], sizes = [16, 16], strides = [1, 1]} : vector<16x128xf32> to vector<16x16xf32>
    %161 = vector.extract_strided_slice %21 {offsets = [0, 16], sizes = [16, 16], strides = [1, 1]} : vector<16x32xf32> to vector<16x16xf32>
    %162 = arith.mulf %159, %159 : vector<16x16xf32>
    %cst_51 = arith.constant dense<0.000000e+00> : vector<16xf32>
    %163 = vector.multi_reduction <add>, %162, %cst_51 [1] : vector<16x16xf32> to vector<16xf32>
    %164 = vector.shape_cast %163 : vector<16xf32> to vector<16x1xf32>
    %cst_52 = arith.constant 1.600000e+01 : f32
    %165 = vector.broadcast %cst_52 : f32 to vector<16x1xf32>
    %166 = arith.divf %164, %165 : vector<16x1xf32>
    %cst_53 = arith.constant 1.1920929E-7 : f32
    %167 = vector.broadcast %cst_53 : f32 to vector<16x1xf32>
    %168 = arith.addf %166, %167 : vector<16x1xf32>
    %169 = math.rsqrt %168 : vector<16x1xf32>
    %cst_54 = arith.constant 2.500000e-01 : f32
    %170 = vector.broadcast %cst_54 : f32 to vector<16x1xf32>
    %171 = arith.mulf %169, %170 : vector<16x1xf32>
    %172 = vector.broadcast %171 : vector<16x1xf32> to vector<16x16xf32>
    %173 = arith.mulf %159, %172 : vector<16x16xf32>
    %174 = arith.mulf %160, %160 : vector<16x16xf32>
    %cst_55 = arith.constant dense<0.000000e+00> : vector<16xf32>
    %175 = vector.multi_reduction <add>, %174, %cst_55 [1] : vector<16x16xf32> to vector<16xf32>
    %176 = vector.shape_cast %175 : vector<16xf32> to vector<16x1xf32>
    %cst_56 = arith.constant 1.600000e+01 : f32
    %177 = vector.broadcast %cst_56 : f32 to vector<16x1xf32>
    %178 = arith.divf %176, %177 : vector<16x1xf32>
    %cst_57 = arith.constant 1.1920929E-7 : f32
    %179 = vector.broadcast %cst_57 : f32 to vector<16x1xf32>
    %180 = arith.addf %178, %179 : vector<16x1xf32>
    %181 = math.rsqrt %180 : vector<16x1xf32>
    %182 = vector.broadcast %181 : vector<16x1xf32> to vector<16x16xf32>
    %183 = arith.mulf %160, %182 : vector<16x16xf32>
    %184 = arith.truncf %173 : vector<16x16xf32> to vector<16x16xbf16>
    %185 = arith.truncf %183 : vector<16x16xf32> to vector<16x16xbf16>
    %cst_58 = arith.constant dense<0.000000e+00> : vector<16x16xf32>
    %186 = tpu.matmul %184, %185, %cst_58 {dimension_numbers = #tpu.dot_dimension_numbers<[1], [1], [0], [0], [0, 0, 1, 0], [], []>} : vector<16x16xbf16>, vector<16x16xbf16>, vector<16x16xf32> -> vector<16x16xf32>
    %187 = arith.addf %186, %32 : vector<16x16xf32>
    %cst_59 = arith.constant dense<0xFF800000> : vector<16xf32>
    %188 = vector.multi_reduction <maximumf>, %187, %cst_59 [1] : vector<16x16xf32> to vector<16xf32>
    %189 = vector.shape_cast %188 : vector<16xf32> to vector<16x1xf32>
    %190 = vector.broadcast %189 : vector<16x1xf32> to vector<16x16xf32>
    %191 = arith.subf %187, %190 : vector<16x16xf32>
    %192 = math.exp %191 : vector<16x16xf32>
    %cst_60 = arith.constant dense<0.000000e+00> : vector<16xf32>
    %193 = vector.multi_reduction <add>, %192, %cst_60 [1] : vector<16x16xf32> to vector<16xf32>
    %194 = vector.shape_cast %193 : vector<16xf32> to vector<16x1xf32>
    %195 = tpu.reciprocal %194 {approx = true} : vector<16x1xf32> -> vector<16x1xf32>
    %196 = vector.broadcast %195 : vector<16x1xf32> to vector<16x16xf32>
    %197 = arith.mulf %192, %196 : vector<16x16xf32>
    %198 = arith.truncf %197 : vector<16x16xf32> to vector<16x16xbf16>
    %199 = arith.truncf %161 : vector<16x16xf32> to vector<16x16xbf16>
    %cst_61 = arith.constant dense<0.000000e+00> : vector<16x16xf32>
    %200 = tpu.matmul %198, %199, %cst_61 {dimension_numbers = #tpu.dot_dimension_numbers<[1], [0], [0], [1], [0, 0, 1, 1], [], []>} : vector<16x16xbf16>, vector<16x16xbf16>, vector<16x16xf32> -> vector<16x16xf32>
    %201 = tpu.concatenate %74, %116, %158, %200 in 1 : vector<16x16xf32>, vector<16x16xf32>, vector<16x16xf32>, vector<16x16xf32> -> vector<16x64xf32>
    %202 = arith.truncf %201 : vector<16x64xf32> to vector<16x64xbf16>
    %c0_62 = arith.constant 0 : index
    %c0_63 = arith.constant 0 : index
    %203 = vector.load %arg8[%c0_62, %c0_63] : memref<64x64xbf16, #tpu.memory_space<vmem>>, vector<64x64xbf16>
    %cst_64 = arith.constant dense<0.000000e+00> : vector<16x64xf32>
    %204 = tpu.matmul %202, %203, %cst_64 {dimension_numbers = #tpu.dot_dimension_numbers<[1], [0], [0], [1], [0, 0, 1, 1], [], []>} : vector<16x64xbf16>, vector<64x64xbf16>, vector<16x64xf32> -> vector<16x64xf32>
    %205 = arith.addf %204, %0 : vector<16x64xf32>
    %206 = arith.mulf %205, %205 : vector<16x64xf32>
    %cst_65 = arith.constant dense<0.000000e+00> : vector<16xf32>
    %207 = vector.multi_reduction <add>, %206, %cst_65 [1] : vector<16x64xf32> to vector<16xf32>
    %208 = vector.shape_cast %207 : vector<16xf32> to vector<16x1xf32>
    %cst_66 = arith.constant 6.400000e+01 : f32
    %209 = vector.broadcast %cst_66 : f32 to vector<16x1xf32>
    %210 = arith.divf %208, %209 : vector<16x1xf32>
    %cst_67 = arith.constant 9.99999974E-6 : f32
    %211 = vector.broadcast %cst_67 : f32 to vector<16x1xf32>
    %212 = arith.addf %210, %211 : vector<16x1xf32>
    %213 = math.rsqrt %212 : vector<16x1xf32>
    %214 = vector.broadcast %213 : vector<16x1xf32> to vector<16x64xf32>
    %215 = arith.mulf %205, %214 : vector<16x64xf32>
    %c0_68 = arith.constant 0 : index
    %c0_69 = arith.constant 0 : index
    %216 = vector.load %arg3[%c0_68, %c0_69] : memref<1x64xf32, #tpu.memory_space<vmem>>, vector<1x64xf32>
    %217 = vector.broadcast %216 : vector<1x64xf32> to vector<16x64xf32>
    %218 = arith.mulf %215, %217 : vector<16x64xf32>
    %219 = arith.mulf %218, %218 : vector<16x64xf32>
    %cst_70 = arith.constant dense<0.000000e+00> : vector<16xf32>
    %220 = vector.multi_reduction <add>, %219, %cst_70 [1] : vector<16x64xf32> to vector<16xf32>
    %221 = vector.shape_cast %220 : vector<16xf32> to vector<16x1xf32>
    %cst_71 = arith.constant 6.400000e+01 : f32
    %222 = vector.broadcast %cst_71 : f32 to vector<16x1xf32>
    %223 = arith.divf %221, %222 : vector<16x1xf32>
    %cst_72 = arith.constant 9.99999974E-6 : f32
    %224 = vector.broadcast %cst_72 : f32 to vector<16x1xf32>
    %225 = arith.addf %223, %224 : vector<16x1xf32>
    %226 = math.rsqrt %225 : vector<16x1xf32>
    %227 = vector.broadcast %226 : vector<16x1xf32> to vector<16x64xf32>
    %228 = arith.mulf %218, %227 : vector<16x64xf32>
    %c0_73 = arith.constant 0 : index
    %c0_74 = arith.constant 0 : index
    %229 = vector.load %arg4[%c0_73, %c0_74] : memref<1x64xf32, #tpu.memory_space<vmem>>, vector<1x64xf32>
    %230 = vector.broadcast %229 : vector<1x64xf32> to vector<16x64xf32>
    %231 = arith.mulf %228, %230 : vector<16x64xf32>
    %232 = arith.truncf %231 : vector<16x64xf32> to vector<16x64xbf16>
    %c0_75 = arith.constant 0 : index
    %c0_76 = arith.constant 0 : index
    %233 = vector.load %arg9[%c0_75, %c0_76] : memref<64x256xbf16, #tpu.memory_space<vmem>>, vector<64x256xbf16>
    %cst_77 = arith.constant dense<0.000000e+00> : vector<16x256xf32>
    %234 = tpu.matmul %232, %233, %cst_77 {dimension_numbers = #tpu.dot_dimension_numbers<[1], [0], [0], [1], [0, 0, 1, 1], [], []>} : vector<16x64xbf16>, vector<64x256xbf16>, vector<16x256xf32> -> vector<16x256xf32>
    %235 = vector.extract_strided_slice %234 {offsets = [0, 0], sizes = [16, 128], strides = [1, 1]} : vector<16x256xf32> to vector<16x128xf32>
    %236 = vector.extract_strided_slice %234 {offsets = [0, 128], sizes = [16, 128], strides = [1, 1]} : vector<16x256xf32> to vector<16x128xf32>
    %237 = arith.negf %235 : vector<16x128xf32>
    %238 = math.exp %237 : vector<16x128xf32>
    %cst_78 = arith.constant 1.000000e+00 : f32
    %239 = vector.broadcast %cst_78 : f32 to vector<16x128xf32>
    %240 = arith.addf %239, %238 : vector<16x128xf32>
    %241 = arith.divf %239, %240 : vector<16x128xf32>
    %242 = arith.mulf %235, %241 : vector<16x128xf32>
    %243 = arith.mulf %242, %236 : vector<16x128xf32>
    %244 = arith.truncf %243 : vector<16x128xf32> to vector<16x128xbf16>
    %c0_79 = arith.constant 0 : index
    %c0_80 = arith.constant 0 : index
    %245 = vector.load %arg10[%c0_79, %c0_80] : memref<128x64xbf16, #tpu.memory_space<vmem>>, vector<128x64xbf16>
    %cst_81 = arith.constant dense<0.000000e+00> : vector<16x64xf32>
    %246 = tpu.matmul %244, %245, %cst_81 {dimension_numbers = #tpu.dot_dimension_numbers<[1], [0], [0], [1], [0, 0, 1, 1], [], []>} : vector<16x128xbf16>, vector<128x64xbf16>, vector<16x64xf32> -> vector<16x64xf32>
    %247 = arith.addf %246, %218 : vector<16x64xf32>
    %248 = arith.mulf %247, %247 : vector<16x64xf32>
    %cst_82 = arith.constant dense<0.000000e+00> : vector<16xf32>
    %249 = vector.multi_reduction <add>, %248, %cst_82 [1] : vector<16x64xf32> to vector<16xf32>
    %250 = vector.shape_cast %249 : vector<16xf32> to vector<16x1xf32>
    %cst_83 = arith.constant 6.400000e+01 : f32
    %251 = vector.broadcast %cst_83 : f32 to vector<16x1xf32>
    %252 = arith.divf %250, %251 : vector<16x1xf32>
    %cst_84 = arith.constant 9.99999974E-6 : f32
    %253 = vector.broadcast %cst_84 : f32 to vector<16x1xf32>
    %254 = arith.addf %252, %253 : vector<16x1xf32>
    %255 = math.rsqrt %254 : vector<16x1xf32>
    %256 = vector.broadcast %255 : vector<16x1xf32> to vector<16x64xf32>
    %257 = arith.mulf %247, %256 : vector<16x64xf32>
    %c0_85 = arith.constant 0 : index
    %c0_86 = arith.constant 0 : index
    %258 = vector.load %arg5[%c0_85, %c0_86] : memref<1x64xf32, #tpu.memory_space<vmem>>, vector<1x64xf32>
    %259 = vector.broadcast %258 : vector<1x64xf32> to vector<16x64xf32>
    %260 = arith.mulf %257, %259 : vector<16x64xf32>
    %c0_87 = arith.constant 0 : index
    %c0_88 = arith.constant 0 : index
    %261 = vector.load %arg15[%c0_87, %c0_88] : memref<16x64xf32, #tpu.memory_space<vmem>>, vector<16x64xf32>
    tpu.vector_store %arg15[%c0_87, %c0_88], %260 {strides = array<i32>} : memref<16x64xf32, #tpu.memory_space<vmem>>, vector<16x64xf32>,
    return
  }
  func.func @transform_0(%arg0: i32) -> (i32, i32) {
    %c0_i32 = arith.constant 0 : i32
    %c0_i32_0 = arith.constant 0 : i32
    return %arg0, %c0_i32 : i32, i32
  }
  func.func @transform_1(%arg0: i32) -> (i32, i32) {
    %c0_i32 = arith.constant 0 : i32
    %c0_i32_0 = arith.constant 0 : i32
    %c0_i32_1 = arith.constant 0 : i32
    return %c0_i32, %c0_i32_0 : i32, i32
  }
  func.func @transform_2(%arg0: i32) -> (i32, i32) {
    %c0_i32 = arith.constant 0 : i32
    %c0_i32_0 = arith.constant 0 : i32
    %c0_i32_1 = arith.constant 0 : i32
    return %c0_i32, %c0_i32_0 : i32, i32
  }
  func.func @transform_3(%arg0: i32) -> (i32, i32) {
    %c0_i32 = arith.constant 0 : i32
    %c0_i32_0 = arith.constant 0 : i32
    %c0_i32_1 = arith.constant 0 : i32
    return %c0_i32, %c0_i32_0 : i32, i32
  }
  func.func @transform_4(%arg0: i32) -> (i32, i32) {
    %c0_i32 = arith.constant 0 : i32
    %c0_i32_0 = arith.constant 0 : i32
    %c0_i32_1 = arith.constant 0 : i32
    return %c0_i32, %c0_i32_0 : i32, i32
  }
  func.func @transform_5(%arg0: i32) -> (i32, i32) {
    %c0_i32 = arith.constant 0 : i32
    %c0_i32_0 = arith.constant 0 : i32
    %c0_i32_1 = arith.constant 0 : i32
    return %c0_i32, %c0_i32_0 : i32, i32
  }
  func.func @transform_6(%arg0: i32) -> (i32, i32) {
    %c0_i32 = arith.constant 0 : i32
    %c0_i32_0 = arith.constant 0 : i32
    %c0_i32_1 = arith.constant 0 : i32
    return %c0_i32, %c0_i32_0 : i32, i32
  }
  func.func @transform_7(%arg0: i32) -> (i32, i32) {
    %c0_i32 = arith.constant 0 : i32
    %c0_i32_0 = arith.constant 0 : i32
    %c0_i32_1 = arith.constant 0 : i32
    return %c0_i32, %c0_i32_0 : i32, i32
  }
  func.func @transform_8(%arg0: i32) -> (i32, i32) {
    %c0_i32 = arith.constant 0 : i32
    %c0_i32_0 = arith.constant 0 : i32
    %c0_i32_1 = arith.constant 0 : i32
    return %c0_i32, %c0_i32_0 : i32, i32
  }
  func.func @transform_9(%arg0: i32) -> (i32, i32) {
    %c0_i32 = arith.constant 0 : i32
    %c0_i32_0 = arith.constant 0 : i32
    %c0_i32_1 = arith.constant 0 : i32
    return %c0_i32, %c0_i32_0 : i32, i32
  }
  func.func @transform_10(%arg0: i32) -> (i32, i32) {
    %c0_i32 = arith.constant 0 : i32
    %c0_i32_0 = arith.constant 0 : i32
    %c0_i32_1 = arith.constant 0 : i32
    return %c0_i32, %c0_i32_0 : i32, i32
  }
  func.func @transform_11(%arg0: i32) -> (i32, i32) {
    %c0_i32 = arith.constant 0 : i32
    %c0_i32_0 = arith.constant 0 : i32
    %c0_i32_1 = arith.constant 0 : i32
    return %c0_i32, %c0_i32_0 : i32, i32
  }
  func.func @transform_12(%arg0: i32) -> (i32, i32) {
    %c0_i32 = arith.constant 0 : i32
    %c0_i32_0 = arith.constant 0 : i32
    %c0_i32_1 = arith.constant 0 : i32
    return %c0_i32, %c0_i32_0 : i32, i32
  }
  func.func @transform_13(%arg0: i32) -> (i32, i32) {
    %c0_i32 = arith.constant 0 : i32
    %c0_i32_0 = arith.constant 0 : i32
    %c0_i32_1 = arith.constant 0 : i32
    return %c0_i32, %c0_i32_0 : i32, i32
  }
  func.func @transform_14(%arg0: i32) -> (i32, i32) {
    %c0_i32 = arith.constant 0 : i32
    %c0_i32_0 = arith.constant 0 : i32
    return %arg0, %c0_i32 : i32, i32
  }
}

</mosaic_0001>

<llo_original>
// kernel: sandwich_forward.1
$region0: #{sandwich_forward.1}
  #allocation0 [shape = 'u32[]', space=smem, size = 0x4, offset = 0x4, fixed_abs, tag = 'smem constant byte address 0x4 - core index']
  #allocation1 [shape = 'u32[72,128]{1,0:T(1,128)}', space=vmem, size = 0x9000, scoped, tag = 'internal scratch']
  %s0 = inlined_call_operand.hbm [shape: f32[16,64], index: 0, kind: input, shape index: {}]
  %s1 = inlined_call_operand.vmem [shape: f32[1,64], index: 1, kind: input, shape index: {}]
  %s2 = inlined_call_operand.vmem [shape: f32[1,64], index: 2, kind: input, shape index: {}]
  %s3 = inlined_call_operand.vmem [shape: f32[1,64], index: 3, kind: input, shape index: {}]
  %s4 = inlined_call_operand.vmem [shape: f32[1,64], index: 4, kind: input, shape index: {}]
  %s5 = inlined_call_operand.vmem [shape: bf16[64,160], index: 5, kind: input, shape index: {}]
  %s6 = inlined_call_operand.vmem [shape: f32[1,128], index: 6, kind: input, shape index: {}]
  %s7 = inlined_call_operand.vmem [shape: bf16[64,64], index: 7, kind: input, shape index: {}]
  %s8 = inlined_call_operand.hbm [shape: bf16[64,256], index: 8, kind: input, shape index: {}]
  %s9 = inlined_call_operand.vmem [shape: bf16[128,64], index: 9, kind: input, shape index: {}]
  %s10 = inlined_call_operand.hbm [shape: f32[16,128], index: 10, kind: input, shape index: {}]
  %s11 = inlined_call_operand.hbm [shape: f32[16,128], index: 11, kind: input, shape index: {}]
  %s12 = inlined_call_operand.hbm [shape: f32[16,128], index: 12, kind: input, shape index: {}]
  %s13 = inlined_call_operand.hbm [shape: f32[16,16], index: 13, kind: input, shape index: {}]
  %s14 = inlined_call_operand.hbm [shape: f32[16,64], index: 14, kind: output, shape index: {}]
  %s15 = sld [smem:[#allocation0]]
  $region90: #{sandwich_forward.1} parent=0
    _
  %s17 = ssub.s32 1, %s15
  %s18 = scalar_select 0, %s17, %s15
  $region1: #{sandwich_forward.1} parent=0
    #allocation2 [shape = 'u8[8192]{0}', space=vmem, size = 0x2000, scoped, tag = 'input window, operand 0, single buffered']
    #allocation3 [shape = 's32[1]{0}', space=sflag, size = 0x4, scoped, tag = 'scoped memory for sandwich_forward.1']
    #allocation4 [shape = 's32[1]{0}', space=sflag, size = 0x4, scoped, tag = 'scoped memory for sandwich_forward.1']
    #allocation5 [shape = 'u8[32768]{0}', space=vmem, size = 0x8000, scoped, tag = 'input window, operand 8, single buffered']
    #allocation6 [shape = 's32[1]{0}', space=sflag, size = 0x4, scoped, tag = 'scoped memory for sandwich_forward.1']
    #allocation7 [shape = 'u8[8192]{0}', space=vmem, size = 0x2000, scoped, tag = 'input window, operand 10, single buffered']
    #allocation8 [shape = 'u8[8192]{0}', space=vmem, size = 0x2000, scoped, tag = 'input window, operand 11, single buffered']
    #allocation9 [shape = 's32[1]{0}', space=sflag, size = 0x4, scoped, tag = 'scoped memory for sandwich_forward.1']
    #allocation10 [shape = 'u8[8192]{0}', space=vmem, size = 0x2000, scoped, tag = 'input window, operand 12, single buffered']
    #allocation11 [shape = 'u8[8192]{0}', space=vmem, size = 0x2000, scoped, tag = 'input window, operand 13, single buffered']
    #allocation12 [shape = 's32[1]{0}', space=sflag, size = 0x4, scoped, tag = 'scoped memory for sandwich_forward.1']
    #allocation13 [shape = 'u8[8192]{0}', space=vmem, size = 0x2000, scoped, tag = 'output window, operand 0, single buffered']
    %19 = vsyncpa [#allocation3], 0
    %20 = vsyncpa [#allocation6], 0
    %21 = vsyncpa [#allocation9], 0
    %22 = vsyncpa [#allocation12], 0
    %23 = vsyncpa [#allocation4], 0
    // Predicated region
    $region2: #{sandwich_forward.1} parent=1 // pred_check
      _
    $region3: #{sandwich_forward.1} parent=1 // pred_check_branch
      %25 = sbr.rel (0) target = $region5
    $region4: #{sandwich_forward.1} parent=1 // pred_region
      %27 = vsyncadd [#allocation3], 0
      %s28 = sshll.u32 %s0, 4
      %s29 = int_to_ptr.hbm [resolvable:$true] %s28
      %s30 = sshll.u32 [#allocation2], 4
      %s31 = int_to_ptr.vmem [resolvable:$true] %s30
      %36 = dma.hbm_to_vmem [thread:$0]  %s29, 256, %s31, [#allocation3], 128, 128, 8
    $region5: #{sandwich_forward.1} parent=1 // pred_fallthru
      _
    // Predicated region
    $region6: #{sandwich_forward.1} parent=1 // pred_check
      _
    $region7: #{sandwich_forward.1} parent=1 // pred_check_branch
      %38 = sbr.rel (0) target = $region9
    $region8: #{sandwich_forward.1} parent=1 // pred_region
      _
    $region9: #{sandwich_forward.1} parent=1 // pred_fallthru
      _
    // Predicated region
    $region10: #{sandwich_forward.1} parent=1 // pred_check
      _
    $region11: #{sandwich_forward.1} parent=1 // pred_check_branch
      %40 = sbr.rel (0) target = $region13
    $region12: #{sandwich_forward.1} parent=1 // pred_region
      _
    $region13: #{sandwich_forward.1} parent=1 // pred_fallthru
      _
    // Predicated region
    $region14: #{sandwich_forward.1} parent=1 // pred_check
      _
    $region15: #{sandwich_forward.1} parent=1 // pred_check_branch
      %42 = sbr.rel (0) target = $region17
    $region16: #{sandwich_forward.1} parent=1 // pred_region
      _
    $region17: #{sandwich_forward.1} parent=1 // pred_fallthru
      _
    // Predicated region
    $region18: #{sandwich_forward.1} parent=1 // pred_check
      _
    $region19: #{sandwich_forward.1} parent=1 // pred_check_branch
      %44 = sbr.rel (0) target = $region21
    $region20: #{sandwich_forward.1} parent=1 // pred_region
      _
    $region21: #{sandwich_forward.1} parent=1 // pred_fallthru
      _
    // Predicated region
    $region22: #{sandwich_forward.1} parent=1 // pred_check
      _
    $region23: #{sandwich_forward.1} parent=1 // pred_check_branch
      %46 = sbr.rel (0) target = $region25
    $region24: #{sandwich_forward.1} parent=1 // pred_region
      _
    $region25: #{sandwich_forward.1} parent=1 // pred_fallthru
      _
    // Predicated region
    $region26: #{sandwich_forward.1} parent=1 // pred_check
      _
    $region27: #{sandwich_forward.1} parent=1 // pred_check_branch
      %48 = sbr.rel (0) target = $region29
    $region28: #{sandwich_forward.1} parent=1 // pred_region
      _
    $region29: #{sandwich_forward.1} parent=1 // pred_fallthru
      _
    // Predicated region
    $region30: #{sandwich_forward.1} parent=1 // pred_check
      _
    $region31: #{sandwich_forward.1} parent=1 // pred_check_branch
      %50 = sbr.rel (0) target = $region33
    $region32: #{sandwich_forward.1} parent=1 // pred_region
      _
    $region33: #{sandwich_forward.1} parent=1 // pred_fallthru
      _
    // Predicated region
    $region34: #{sandwich_forward.1} parent=1 // pred_check
      _
    $region35: #{sandwich_forward.1} parent=1 // pred_check_branch
      %52 = sbr.rel (0) target = $region37
    $region36: #{sandwich_forward.1} parent=1 // pred_region
      %54 = vsyncadd [#allocation6], 0
      %s55 = sshll.u32 %s8, 4
      %s56 = int_to_ptr.hbm [resolvable:$true] %s55
      %s57 = sshll.u32 [#allocation5], 4
      %s58 = int_to_ptr.vmem [resolvable:$true] %s57
      %63 = dma.hbm_to_vmem [thread:$0]  %s56, 1024, %s58, [#allocation6], 128, 128, 8
    $region37: #{sandwich_forward.1} parent=1 // pred_fallthru
      _
    // Predicated region
    $region38: #{sandwich_forward.1} parent=1 // pred_check
      _
    $region39: #{sandwich_forward.1} parent=1 // pred_check_branch
      %65 = sbr.rel (0) target = $region41
    $region40: #{sandwich_forward.1} parent=1 // pred_region
      _
    $region41: #{sandwich_forward.1} parent=1 // pred_fallthru
      _
    // Predicated region
    $region42: #{sandwich_forward.1} parent=1 // pred_check
      _
    $region43: #{sandwich_forward.1} parent=1 // pred_check_branch
      %67 = sbr.rel (0) target = $region45
    $region44: #{sandwich_forward.1} parent=1 // pred_region
      %69 = vsyncadd [#allocation6], 0
      %s70 = sshll.u32 %s10, 4
      %s71 = int_to_ptr.hbm [resolvable:$true] %s70
      %s72 = sshll.u32 [#allocation7], 4
      %s73 = int_to_ptr.vmem [resolvable:$true] %s72
      %78 = dma.hbm_to_vmem [thread:$0]  %s71, 256, %s73, [#allocation6], 128, 128, 8
    $region45: #{sandwich_forward.1} parent=1 // pred_fallthru
      _
    // Predicated region
    $region46: #{sandwich_forward.1} parent=1 // pred_check
      _
    $region47: #{sandwich_forward.1} parent=1 // pred_check_branch
      %80 = sbr.rel (0) target = $region49
    $region48: #{sandwich_forward.1} parent=1 // pred_region
      %82 = vsyncadd [#allocation9], 0
      %s83 = sshll.u32 %s11, 4
      %s84 = int_to_ptr.hbm [resolvable:$true] %s83
      %s85 = sshll.u32 [#allocation8], 4
      %s86 = int_to_ptr.vmem [resolvable:$true] %s85
      %91 = dma.hbm_to_vmem [thread:$0]  %s84, 256, %s86, [#allocation9], 128, 128, 8
    $region49: #{sandwich_forward.1} parent=1 // pred_fallthru
      _
    // Predicated region
    $region50: #{sandwich_forward.1} parent=1 // pred_check
      _
    $region51: #{sandwich_forward.1} parent=1 // pred_check_branch
      %93 = sbr.rel (0) target = $region53
    $region52: #{sandwich_forward.1} parent=1 // pred_region
      %95 = vsyncadd [#allocation9], 0
      %s96 = sshll.u32 %s12, 4
      %s97 = int_to_ptr.hbm [resolvable:$true] %s96
      %s98 = sshll.u32 [#allocation10], 4
      %s99 = int_to_ptr.vmem [resolvable:$true] %s98
      %104 = dma.hbm_to_vmem [thread:$0]  %s97, 256, %s99, [#allocation9], 128, 128, 8
    $region53: #{sandwich_forward.1} parent=1 // pred_fallthru
      _
    // Predicated region
    $region54: #{sandwich_forward.1} parent=1 // pred_check
      _
    $region55: #{sandwich_forward.1} parent=1 // pred_check_branch
      %106 = sbr.rel (0) target = $region57
    $region56: #{sandwich_forward.1} parent=1 // pred_region
      %108 = vsyncadd [#allocation12], 0
      %s109 = sshll.u32 %s13, 4
      %s110 = int_to_ptr.hbm [resolvable:$true] %s109
      %s111 = sshll.u32 [#allocation11], 4
      %s112 = int_to_ptr.vmem [resolvable:$true] %s111
      %117 = dma.hbm_to_vmem [thread:$0]  %s110, 256, %s112, [#allocation12], 128, 128, 8
    $region57: #{sandwich_forward.1} parent=1 // pred_fallthru
      _
    // Predicated region
    $region58: #{sandwich_forward.1} parent=1 // pred_check
      _
    $region59: #{sandwich_forward.1} parent=1 // pred_check_branch
      %119 = sbr.rel (0) target = $region61
    $region60: #{sandwich_forward.1} parent=1 // pred_region
      %121 = dma.done [#allocation3], 256
    $region61: #{sandwich_forward.1} parent=1 // pred_fallthru
      _
    // Predicated region
    $region62: #{sandwich_forward.1} parent=1 // pred_check
      _
    $region63: #{sandwich_forward.1} parent=1 // pred_check_branch
      %123 = sbr.rel (0) target = $region65
    $region64: #{sandwich_forward.1} parent=1 // pred_region
      %125 = dma.done [#allocation6], 1024
    $region65: #{sandwich_forward.1} parent=1 // pred_fallthru
      _
    // Predicated region
    $region66: #{sandwich_forward.1} parent=1 // pred_check
      _
    $region67: #{sandwich_forward.1} parent=1 // pred_check_branch
      %127 = sbr.rel (0) target = $region69
    $region68: #{sandwich_forward.1} parent=1 // pred_region
      %129 = dma.done [#allocation6], 256
    $region69: #{sandwich_forward.1} parent=1 // pred_fallthru
      _
    // Predicated region
    $region70: #{sandwich_forward.1} parent=1 // pred_check
      _
    $region71: #{sandwich_forward.1} parent=1 // pred_check_branch
      %131 = sbr.rel (0) target = $region73
    $region72: #{sandwich_forward.1} parent=1 // pred_region
      %133 = dma.done [#allocation9], 256
    $region73: #{sandwich_forward.1} parent=1 // pred_fallthru
      _
    // Predicated region
    $region74: #{sandwich_forward.1} parent=1 // pred_check
      _
    $region75: #{sandwich_forward.1} parent=1 // pred_check_branch
      %135 = sbr.rel (0) target = $region77
    $region76: #{sandwich_forward.1} parent=1 // pred_region
      %137 = dma.done [#allocation9], 256
    $region77: #{sandwich_forward.1} parent=1 // pred_fallthru
      _
    // Predicated region
    $region78: #{sandwich_forward.1} parent=1 // pred_check
      _
    $region79: #{sandwich_forward.1} parent=1 // pred_check_branch
      %139 = sbr.rel (0) target = $region81
    $region80: #{sandwich_forward.1} parent=1 // pred_region
      %141 = dma.done [#allocation12], 256
    $region81: #{sandwich_forward.1} parent=1 // pred_fallthru
      _
    %v143 = vld [vmem:[#allocation2] sm:$0xff]
    %v144 = vld [vmem:[#allocation2 + $0x8] sm:$0xff]
    %v145 = vmul.f32 %v143, %v143
    %v146 = vmul.f32 %v144, %v144
    %vm147 = vcmask 523264
    %v148 = vsel %vm147, %v145, 0.0
    %149 = vadd.xlane.f32.xlu0 %v148
    %v150 = vpop.xlane.xlu0 %149
    %v151 = vsel %vm147, %v146, 0.0
    %152 = vadd.xlane.f32.xlu0 %v151
    %v153 = vpop.xlane.xlu0 %152
    %v154 = vrcp.pop 64.0
    %v155 = vmul.f32 64.0, %v154
    %v156 = vsub.f32 1.0, %v155
    %v157 = vmul.f32 %v154, %v156
    %v158 = vadd.f32 %v154, %v157
    %vm159 = vweird.f32 %v154
    %v160 = vsel %vm159, %v154, %v158
    %v161 = vmul.f32 %v150, %v160
    %v162 = vmul.f32 %v153, %v160
    %v163 = vadd.f32 %v161, 1e-05
    %v164 = vadd.f32 %v162, 1e-05
    %v165 = vrsqrt.pop %v163
    %v166 = vmul.f32 %v165, %v163
    %v167 = vmul.f32 %v166, %v165
    %v168 = vmul.f32 0.5, %v167
    %v169 = vsub.f32 1.5, %v168
    %v170 = vmul.f32 %v165, %v169
    %vm171 = vweird.f32 %v163
    %vm172 = vweird.f32 %v165
    %vm173 = vmor %vm171, %vm172
    %v174 = vsel %vm173, %v165, %v170
    %v175 = vrsqrt.pop %v164
    %v176 = vmul.f32 %v175, %v164
    %v177 = vmul.f32 %v176, %v175
    %v178 = vmul.f32 0.5, %v177
    %v179 = vsub.f32 1.5, %v178
    %v180 = vmul.f32 %v175, %v179
    %vm181 = vweird.f32 %v164
    %vm182 = vweird.f32 %v175
    %vm183 = vmor %vm181, %vm182
    %v184 = vsel %vm183, %v175, %v180
    %v185 = vmul.f32 %v143, %v174
    %v186 = vmul.f32 %v144, %v184
    %v187 = vld [vmem:[%s1] sm:$0x1]
    %v189 = vperm.slane %v187, 0
    %v191 = vmul.f32 %v185, %v189
    %v192 = vmul.f32 %v186, %v189
    %v193 = vpack.c.bf16 %v192, %v191
    %v194 = vld [vmem:[%s5] sm:$0xff]
    %v195 = vld [vmem:[%s5 + $0x8] sm:$0xff]
    %v196 = vld [vmem:[%s5 + $0x10] sm:$0xff]
    %v197 = vld [vmem:[%s5 + $0x18] sm:$0xff]
    %v198 = vld [vmem:[%s5 + $0x20] sm:$0xff]
    %v199 = vld [vmem:[%s5 + $0x28] sm:$0xff]
    %v200 = vld [vmem:[%s5 + $0x30] sm:$0xff]
    %v201 = vld [vmem:[%s5 + $0x38] sm:$0xff]
    %v210 = vunpack.c.l.b16 %v194
    %v211 = vunpack.c.h.b16 %v194
    %v212 = vunpack.c.l.b16 %v195
    %v213 = vunpack.c.h.b16 %v195
    %v214 = vunpack.c.l.b16 %v196
    %v215 = vunpack.c.h.b16 %v196
    %v216 = vunpack.c.l.b16 %v197
    %v217 = vunpack.c.h.b16 %v197
    %v218 = vunpack.c.l.b16 %v198
    %v219 = vunpack.c.h.b16 %v198
    %v220 = vunpack.c.l.b16 %v199
    %v221 = vunpack.c.h.b16 %v199
    %v222 = vunpack.c.l.b16 %v200
    %v223 = vunpack.c.h.b16 %v200
    %v224 = vunpack.c.l.b16 %v201
    %v225 = vunpack.c.h.b16 %v201
    %v226 = vpack.c.b16 %v212, %v210
    %v227 = vpack.c.b16 %v213, %v211
    %v228 = vpack.c.b16 %v216, %v214
    %v229 = vpack.c.b16 %v217, %v215
    %v230 = vpack.c.b16 %v220, %v218
    %v231 = vpack.c.b16 %v221, %v219
    %v232 = vpack.c.b16 %v224, %v222
    %v233 = vpack.c.b16 %v225, %v223
    %v243 = vsel %vm147, %v193, 0
    %245 = vmatpush.bf16.msra.mxu0 0
    %246 = vmatpush.bf16.msra.mxu0 0
    %247 = vmatpush.bf16.msra.mxu0 0
    %248 = vmatpush.bf16.msra.mxu0 0
    %249 = vmatpush.bf16.msra.mxu0 %v232
    %250 = vmatpush.bf16.msra.mxu0 %v230
    %251 = vmatpush.bf16.msra.mxu0 %v228
    %252 = vmatpush.bf16.msra.mxu0 %v226
    %253 = vmatmul.bf16.gmra.mxu0 %v243
    %v254 = vpop.f32.mrf.mxu0
    %v255 = vadd.f32 0.0, %v254
    %v256 = vpop.f32.mrf.mxu0
    %v257 = vadd.f32 0.0, %v256
    %258 = vdwg.mxu0
    %259 = vmatpush.bf16.msra.mxu0 0
    %260 = vmatpush.bf16.msra.mxu0 0
    %261 = vmatpush.bf16.msra.mxu0 0
    %262 = vmatpush.bf16.msra.mxu0 0
    %263 = vmatpush.bf16.msra.mxu0 %v233
    %264 = vmatpush.bf16.msra.mxu0 %v231
    %265 = vmatpush.bf16.msra.mxu0 %v229
    %266 = vmatpush.bf16.msra.mxu0 %v227
    %267 = vmatmul.bf16.gmra.mxu0 %v243
    %v268 = vpop.f32.mrf.mxu0
    %v269 = vadd.f32 0.0, %v268
    %v270 = vpop.f32.mrf.mxu0
    %v271 = vadd.f32 0.0, %v270
    %272 = vdwg.mxu0
    %v273 = vld [vmem:[%s6] sm:$0x1]
    %v275 = vperm.slane %v273, 0
    %v277 = vadd.f32 %v255, %v275
    %v278 = vadd.f32 %v257, %v275
    %v279 = vld [vmem:[#allocation7] sm:$0xff]
    %v280 = vld [vmem:[#allocation7 + $0x8] sm:$0xff]
    %v281 = vmul.f32 %v277, %v279
    %v282 = vmul.f32 %v278, %v280
    %283 = vrot.lane.b32.xlu0 %v277, 127
    %v284 = vpop.permute.xlu0 %283
    %285 = vrot.lane.b32.xlu0 %v278, 127
    %v286 = vpop.permute.xlu0 %285
    %v287 = vld [vmem:[#allocation8] sm:$0xff]
    %v288 = vld [vmem:[#allocation8 + $0x8] sm:$0xff]
    %v289 = vmul.f32 %v284, %v287
    %v290 = vmul.f32 %v286, %v288
    %v291 = vadd.f32 %v281, %v289
    %v292 = vadd.f32 %v282, %v290
    %293 = vrot.lane.b32.xlu0 %v277, 1
    %v294 = vpop.permute.xlu0 %293
    %295 = vrot.lane.b32.xlu0 %v278, 1
    %v296 = vpop.permute.xlu0 %295
    %v297 = vld [vmem:[#allocation10] sm:$0xff]
    %v298 = vld [vmem:[#allocation10 + $0x8] sm:$0xff]
    %v299 = vmul.f32 %v294, %v297
    %v300 = vmul.f32 %v296, %v298
    %v301 = vadd.f32 %v291, %v299
    %v302 = vadd.f32 %v292, %v300
    %v303 = vld [vmem:[#allocation11] sm:$0xff]
    %v304 = vld [vmem:[#allocation11 + $0x8] sm:$0xff]
    %v305 = vmul.f32 %v301, %v301
    %v306 = vmul.f32 %v302, %v302
    %vm307 = vcmask 130048
    %v308 = vsel %vm307, %v305, 0.0
    %309 = vadd.xlane.f32.xlu0 %v308
    %v310 = vpop.xlane.xlu0 %309
    %v311 = vsel %vm307, %v306, 0.0
    %312 = vadd.xlane.f32.xlu0 %v311
    %v313 = vpop.xlane.xlu0 %312
    %v314 = vrcp.pop 16.0
    %v315 = vmul.f32 16.0, %v314
    %v316 = vsub.f32 1.0, %v315
    %v317 = vmul.f32 %v314, %v316
    %v318 = vadd.f32 %v314, %v317
    %vm319 = vweird.f32 %v314
    %v320 = vsel %vm319, %v314, %v318
    %v321 = vmul.f32 %v310, %v320
    %v322 = vmul.f32 %v313, %v320
    %v323 = vadd.f32 %v321, 1.1920929e-07
    %v324 = vadd.f32 %v322, 1.1920929e-07
    %v325 = vrsqrt.pop %v323
    %v326 = vmul.f32 %v325, %v323
    %v327 = vmul.f32 %v326, %v325
    %v328 = vmul.f32 0.5, %v327
    %v329 = vsub.f32 1.5, %v328
    %v330 = vmul.f32 %v325, %v329
    %vm331 = vweird.f32 %v323
    %vm332 = vweird.f32 %v325
    %vm333 = vmor %vm331, %vm332
    %v334 = vsel %vm333, %v325, %v330
    %v335 = vrsqrt.pop %v324
    %v336 = vmul.f32 %v335, %v324
    %v337 = vmul.f32 %v336, %v335
    %v338 = vmul.f32 0.5, %v337
    %v339 = vsub.f32 1.5, %v338
    %v340 = vmul.f32 %v335, %v339
    %vm341 = vweird.f32 %v324
    %vm342 = vweird.f32 %v335
    %vm343 = vmor %vm341, %vm342
    %v344 = vsel %vm343, %v335, %v340
    %v345 = vmul.f32 %v334, 0.25
    %v346 = vmul.f32 %v344, 0.25
    %v347 = vmul.f32 %v301, %v345
    %v348 = vmul.f32 %v302, %v346
    %351 = vrot.lane.b32.xlu0 %v305, 64
    %v352 = vpop.permute.xlu0 %351
    %353 = vrot.lane.b32.xlu0 %v306, 64
    %v354 = vpop.permute.xlu0 %353
    %v357 = vsel %vm307, %v352, 0.0
    %358 = vadd.xlane.f32.xlu0 %v357
    %v359 = vpop.xlane.xlu0 %358
    %v360 = vsel %vm307, %v354, 0.0
    %361 = vadd.xlane.f32.xlu0 %v360
    %v362 = vpop.xlane.xlu0 %361
    %v363 = vmul.f32 %v359, %v320
    %v364 = vmul.f32 %v362, %v320
    %v365 = vadd.f32 %v363, 1.1920929e-07
    %v366 = vadd.f32 %v364, 1.1920929e-07
    %v367 = vrsqrt.pop %v365
    %v368 = vmul.f32 %v367, %v365
    %v369 = vmul.f32 %v368, %v367
    %v370 = vmul.f32 0.5, %v369
    %v371 = vsub.f32 1.5, %v370
    %v372 = vmul.f32 %v367, %v371
    %vm373 = vweird.f32 %v365
    %vm374 = vweird.f32 %v367
    %vm375 = vmor %vm373, %vm374
    %v376 = vsel %vm375, %v367, %v372
    %v377 = vrsqrt.pop %v366
    %v378 = vmul.f32 %v377, %v366
    %v379 = vmul.f32 %v378, %v377
    %v380 = vmul.f32 0.5, %v379
    %v381 = vsub.f32 1.5, %v380
    %v382 = vmul.f32 %v377, %v381
    %vm383 = vweird.f32 %v366
    %vm384 = vweird.f32 %v377
    %vm385 = vmor %vm383, %vm384
    %v386 = vsel %vm385, %v377, %v382
    %v387 = vmul.f32 %v301, %v376
    %v388 = vmul.f32 %v302, %v386
    %v389 = vpack.c.bf16 %v348, %v347
    %v390 = vpack.c.bf16 %v388, %v387
    %392 = vrot.lane.b32.xlu0 %v390, 64
    %v393 = vpop.permute.xlu0 %392
    %v395 = vsel %vm307, %v389, 0
    %v398 = vsel %vm307, %v393, 0
    %400 = vmatpush.bf16.xpose.msra.mxu0 0
    %401 = vmatpush.bf16.xpose.msra.mxu0 0
    %402 = vmatpush.bf16.xpose.msra.mxu0 0
    %403 = vmatpush.bf16.xpose.msra.mxu0 0
    %404 = vmatpush.bf16.xpose.msra.mxu0 0
    %405 = vmatpush.bf16.xpose.msra.mxu0 0
    %406 = vmatpush.bf16.xpose.msra.mxu0 0
    %407 = vmatpush.bf16.xpose.msra.mxu0 %v398
    %408 = vmatmul.bf16.gmra.mxu0 %v395
    %v409 = vpop.f32.mrf.mxu0
    %v410 = vadd.f32 %v303, %v409
    %v411 = vpop.f32.mrf.mxu0
    %v412 = vadd.f32 %v304, %v411
    %413 = vdwg.mxu0
    %v414 = vsel %vm307, %v410, -inf
    %415 = vmax.xlane.f32.xlu0 %v414
    %v416 = vpop.xlane.xlu0 %415
    %v417 = vsel %vm307, %v412, -inf
    %418 = vmax.xlane.f32.xlu0 %v417
    %v419 = vpop.xlane.xlu0 %418
    %v420 = vsub.f32 %v410, %v416
    %v421 = vsub.f32 %v412, %v419
    %v422 = vmul.f32 %v420, 1.442695
    %v423 = vpow.pop %v422
    %v424 = vmul.f32 %v421, 1.442695
    %v425 = vpow.pop %v424
    %v426 = vsel %vm307, %v423, 0.0
    %427 = vadd.xlane.f32.xlu0 %v426
    %v428 = vpop.xlane.xlu0 %427
    %v429 = vsel %vm307, %v425, 0.0
    %430 = vadd.xlane.f32.xlu0 %v429
    %v431 = vpop.xlane.xlu0 %430
    %v432 = vrcp.pop %v428
    %v433 = vrcp.pop %v431
    %v434 = vmul.f32 %v423, %v432
    %v435 = vmul.f32 %v425, %v433
    %v436 = vpack.c.bf16 %v435, %v434
    %v437 = vpack.c.bf16 %v271, %v269
    %v439 = vsel %vm307, %v436, 0
    %441 = vmatpush.bf16.msra.mxu0 0
    %442 = vmatpush.bf16.msra.mxu0 0
    %443 = vmatpush.bf16.msra.mxu0 0
    %444 = vmatpush.bf16.msra.mxu0 0
    %445 = vmatpush.bf16.msra.mxu0 0
    %446 = vmatpush.bf16.msra.mxu0 0
    %447 = vmatpush.bf16.msra.mxu0 0
    %448 = vmatpush.bf16.msra.mxu0 %v437
    %449 = vmatmul.bf16.gmra.mxu0 %v439
    %v450 = vpop.f32.mrf.mxu0
    %v451 = vadd.f32 0.0, %v450
    %v452 = vpop.f32.mrf.mxu0
    %v453 = vadd.f32 0.0, %v452
    %454 = vdwg.mxu0
    %455 = vrot.lane.b32.xlu0 %v305, 112
    %v456 = vpop.permute.xlu0 %455
    %457 = vrot.lane.b32.xlu0 %v306, 112
    %v458 = vpop.permute.xlu0 %457
    %v461 = vsel %vm307, %v456, 0.0
    %462 = vadd.xlane.f32.xlu0 %v461
    %v463 = vpop.xlane.xlu0 %462
    %v464 = vsel %vm307, %v458, 0.0
    %465 = vadd.xlane.f32.xlu0 %v464
    %v466 = vpop.xlane.xlu0 %465
    %v467 = vmul.f32 %v463, %v320
    %v468 = vmul.f32 %v466, %v320
    %v469 = vadd.f32 %v467, 1.1920929e-07
    %v470 = vadd.f32 %v468, 1.1920929e-07
    %v471 = vrsqrt.pop %v469
    %v472 = vmul.f32 %v471, %v469
    %v473 = vmul.f32 %v472, %v471
    %v474 = vmul.f32 0.5, %v473
    %v475 = vsub.f32 1.5, %v474
    %v476 = vmul.f32 %v471, %v475
    %vm477 = vweird.f32 %v469
    %vm478 = vweird.f32 %v471
    %vm479 = vmor %vm477, %vm478
    %v480 = vsel %vm479, %v471, %v476
    %v481 = vrsqrt.pop %v470
    %v482 = vmul.f32 %v481, %v470
    %v483 = vmul.f32 %v482, %v481
    %v484 = vmul.f32 0.5, %v483
    %v485 = vsub.f32 1.5, %v484
    %v486 = vmul.f32 %v481, %v485
    %vm487 = vweird.f32 %v470
    %vm488 = vweird.f32 %v481
    %vm489 = vmor %vm487, %vm488
    %v490 = vsel %vm489, %v481, %v486
    %v491 = vmul.f32 %v480, 0.25
    %v492 = vmul.f32 %v490, 0.25
    %v493 = vmul.f32 %v301, %v491
    %v494 = vmul.f32 %v302, %v492
    %495 = vrot.lane.b32.xlu0 %v305, 48
    %v496 = vpop.permute.xlu0 %495
    %497 = vrot.lane.b32.xlu0 %v306, 48
    %v498 = vpop.permute.xlu0 %497
    %v501 = vsel %vm307, %v496, 0.0
    %502 = vadd.xlane.f32.xlu0 %v501
    %v503 = vpop.xlane.xlu0 %502
    %v504 = vsel %vm307, %v498, 0.0
    %505 = vadd.xlane.f32.xlu0 %v504
    %v506 = vpop.xlane.xlu0 %505
    %v507 = vmul.f32 %v503, %v320
    %v508 = vmul.f32 %v506, %v320
    %v509 = vadd.f32 %v507, 1.1920929e-07
    %v510 = vadd.f32 %v508, 1.1920929e-07
    %v511 = vrsqrt.pop %v509
    %v512 = vmul.f32 %v511, %v509
    %v513 = vmul.f32 %v512, %v511
    %v514 = vmul.f32 0.5, %v513
    %v515 = vsub.f32 1.5, %v514
    %v516 = vmul.f32 %v511, %v515
    %vm517 = vweird.f32 %v509
    %vm518 = vweird.f32 %v511
    %vm519 = vmor %vm517, %vm518
    %v520 = vsel %vm519, %v511, %v516
    %v521 = vrsqrt.pop %v510
    %v522 = vmul.f32 %v521, %v510
    %v523 = vmul.f32 %v522, %v521
    %v524 = vmul.f32 0.5, %v523
    %v525 = vsub.f32 1.5, %v524
    %v526 = vmul.f32 %v521, %v525
    %vm527 = vweird.f32 %v510
    %vm528 = vweird.f32 %v521
    %vm529 = vmor %vm527, %vm528
    %v530 = vsel %vm529, %v521, %v526
    %v531 = vmul.f32 %v301, %v520
    %v532 = vmul.f32 %v302, %v530
    %v533 = vpack.c.bf16 %v494, %v493
    %v534 = vpack.c.bf16 %v532, %v531
    %536 = vrot.lane.b32.xlu0 %v533, 112
    %v537 = vpop.permute.xlu0 %536
    %539 = vrot.lane.b32.xlu0 %v534, 48
    %v540 = vpop.permute.xlu0 %539
    %v542 = vsel %vm307, %v537, 0
    %v545 = vsel %vm307, %v540, 0
    %547 = vmatpush.bf16.xpose.msra.mxu0 0
    %548 = vmatpush.bf16.xpose.msra.mxu0 0
    %549 = vmatpush.bf16.xpose.msra.mxu0 0
    %550 = vmatpush.bf16.xpose.msra.mxu0 0
    %551 = vmatpush.bf16.xpose.msra.mxu0 0
    %552 = vmatpush.bf16.xpose.msra.mxu0 0
    %553 = vmatpush.bf16.xpose.msra.mxu0 0
    %554 = vmatpush.bf16.xpose.msra.mxu0 %v545
    %555 = vmatmul.bf16.gmra.mxu0 %v542
    %v556 = vpop.f32.mrf.mxu0
    %v557 = vadd.f32 %v303, %v556
    %v558 = vpop.f32.mrf.mxu0
    %v559 = vadd.f32 %v304, %v558
    %560 = vdwg.mxu0
    %v561 = vsel %vm307, %v557, -inf
    %562 = vmax.xlane.f32.xlu0 %v561
    %v563 = vpop.xlane.xlu0 %562
    %v564 = vsel %vm307, %v559, -inf
    %565 = vmax.xlane.f32.xlu0 %v564
    %v566 = vpop.xlane.xlu0 %565
    %v567 = vsub.f32 %v557, %v563
    %v568 = vsub.f32 %v559, %v566
    %v569 = vmul.f32 %v567, 1.442695
    %v570 = vpow.pop %v569
    %v571 = vmul.f32 %v568, 1.442695
    %v572 = vpow.pop %v571
    %v573 = vsel %vm307, %v570, 0.0
    %574 = vadd.xlane.f32.xlu0 %v573
    %v575 = vpop.xlane.xlu0 %574
    %v576 = vsel %vm307, %v572, 0.0
    %577 = vadd.xlane.f32.xlu0 %v576
    %v578 = vpop.xlane.xlu0 %577
    %v579 = vrcp.pop %v575
    %v580 = vrcp.pop %v578
    %v581 = vmul.f32 %v570, %v579
    %v582 = vmul.f32 %v572, %v580
    %v583 = vpack.c.bf16 %v582, %v581
    %v585 = vsel %vm307, %v583, 0
    %587 = vmatpush.bf16.msra.mxu0 0
    %588 = vmatpush.bf16.msra.mxu0 0
    %589 = vmatpush.bf16.msra.mxu0 0
    %590 = vmatpush.bf16.msra.mxu0 0
    %591 = vmatpush.bf16.msra.mxu0 0
    %592 = vmatpush.bf16.msra.mxu0 0
    %593 = vmatpush.bf16.msra.mxu0 0
    %594 = vmatpush.bf16.msra.mxu0 %v437
    %595 = vmatmul.bf16.gmra.mxu0 %v585
    %v596 = vpop.f32.mrf.mxu0
    %v597 = vadd.f32 0.0, %v596
    %v598 = vpop.f32.mrf.mxu0
    %v599 = vadd.f32 0.0, %v598
    %600 = vdwg.mxu0
    %601 = vrot.lane.b32.xlu0 %v305, 96
    %v602 = vpop.permute.xlu0 %601
    %603 = vrot.lane.b32.xlu0 %v306, 96
    %v604 = vpop.permute.xlu0 %603
    %v607 = vsel %vm307, %v602, 0.0
    %608 = vadd.xlane.f32.xlu0 %v607
    %v609 = vpop.xlane.xlu0 %608
    %v610 = vsel %vm307, %v604, 0.0
    %611 = vadd.xlane.f32.xlu0 %v610
    %v612 = vpop.xlane.xlu0 %611
    %v613 = vmul.f32 %v609, %v320
    %v614 = vmul.f32 %v612, %v320
    %v615 = vadd.f32 %v613, 1.1920929e-07
    %v616 = vadd.f32 %v614, 1.1920929e-07
    %v617 = vrsqrt.pop %v615
    %v618 = vmul.f32 %v617, %v615
    %v619 = vmul.f32 %v618, %v617
    %v620 = vmul.f32 0.5, %v619
    %v621 = vsub.f32 1.5, %v620
    %v622 = vmul.f32 %v617, %v621
    %vm623 = vweird.f32 %v615
    %vm624 = vweird.f32 %v617
    %vm625 = vmor %vm623, %vm624
    %v626 = vsel %vm625, %v617, %v622
    %v627 = vrsqrt.pop %v616
    %v628 = vmul.f32 %v627, %v616
    %v629 = vmul.f32 %v628, %v627
    %v630 = vmul.f32 0.5, %v629
    %v631 = vsub.f32 1.5, %v630
    %v632 = vmul.f32 %v627, %v631
    %vm633 = vweird.f32 %v616
    %vm634 = vweird.f32 %v627
    %vm635 = vmor %vm633, %vm634
    %v636 = vsel %vm635, %v627, %v632
    %v637 = vmul.f32 %v626, 0.25
    %v638 = vmul.f32 %v636, 0.25
    %v639 = vmul.f32 %v301, %v637
    %v640 = vmul.f32 %v302, %v638
    %641 = vrot.lane.b32.xlu0 %v305, 32
    %v642 = vpop.permute.xlu0 %641
    %643 = vrot.lane.b32.xlu0 %v306, 32
    %v644 = vpop.permute.xlu0 %643
    %v647 = vsel %vm307, %v642, 0.0
    %648 = vadd.xlane.f32.xlu0 %v647
    %v649 = vpop.xlane.xlu0 %648
    %v650 = vsel %vm307, %v644, 0.0
    %651 = vadd.xlane.f32.xlu0 %v650
    %v652 = vpop.xlane.xlu0 %651
    %v653 = vmul.f32 %v649, %v320
    %v654 = vmul.f32 %v652, %v320
    %v655 = vadd.f32 %v653, 1.1920929e-07
    %v656 = vadd.f32 %v654, 1.1920929e-07
    %v657 = vrsqrt.pop %v655
    %v658 = vmul.f32 %v657, %v655
    %v659 = vmul.f32 %v658, %v657
    %v660 = vmul.f32 0.5, %v659
    %v661 = vsub.f32 1.5, %v660
    %v662 = vmul.f32 %v657, %v661
    %vm663 = vweird.f32 %v655
    %vm664 = vweird.f32 %v657
    %vm665 = vmor %vm663, %vm664
    %v666 = vsel %vm665, %v657, %v662
    %v667 = vrsqrt.pop %v656
    %v668 = vmul.f32 %v667, %v656
    %v669 = vmul.f32 %v668, %v667
    %v670 = vmul.f32 0.5, %v669
    %v671 = vsub.f32 1.5, %v670
    %v672 = vmul.f32 %v667, %v671
    %vm673 = vweird.f32 %v656
    %vm674 = vweird.f32 %v667
    %vm675 = vmor %vm673, %vm674
    %v676 = vsel %vm675, %v667, %v672
    %v677 = vmul.f32 %v301, %v666
    %v678 = vmul.f32 %v302, %v676
    %v679 = vpack.c.bf16 %v640, %v639
    %v680 = vpack.c.bf16 %v678, %v677
    %682 = vrot.lane.b32.xlu0 %v679, 96
    %v683 = vpop.permute.xlu0 %682
    %685 = vrot.lane.b32.xlu0 %v680, 32
    %v686 = vpop.permute.xlu0 %685
    %v688 = vsel %vm307, %v683, 0
    %v691 = vsel %vm307, %v686, 0
    %693 = vmatpush.bf16.xpose.msra.mxu0 0
    %694 = vmatpush.bf16.xpose.msra.mxu0 0
    %695 = vmatpush.bf16.xpose.msra.mxu0 0
    %696 = vmatpush.bf16.xpose.msra.mxu0 0
    %697 = vmatpush.bf16.xpose.msra.mxu0 0
    %698 = vmatpush.bf16.xpose.msra.mxu0 0
    %699 = vmatpush.bf16.xpose.msra.mxu0 0
    %700 = vmatpush.bf16.xpose.msra.mxu0 %v691
    %701 = vmatmul.bf16.gmra.mxu0 %v688
    %v702 = vpop.f32.mrf.mxu0
    %v703 = vadd.f32 %v303, %v702
    %v704 = vpop.f32.mrf.mxu0
    %v705 = vadd.f32 %v304, %v704
    %706 = vdwg.mxu0
    %v707 = vsel %vm307, %v703, -inf
    %708 = vmax.xlane.f32.xlu0 %v707
    %v709 = vpop.xlane.xlu0 %708
    %v710 = vsel %vm307, %v705, -inf
    %711 = vmax.xlane.f32.xlu0 %v710
    %v712 = vpop.xlane.xlu0 %711
    %v713 = vsub.f32 %v703, %v709
    %v714 = vsub.f32 %v705, %v712
    %v715 = vmul.f32 %v713, 1.442695
    %v716 = vpow.pop %v715
    %v717 = vmul.f32 %v714, 1.442695
    %v718 = vpow.pop %v717
    %v719 = vsel %vm307, %v716, 0.0
    %720 = vadd.xlane.f32.xlu0 %v719
    %v721 = vpop.xlane.xlu0 %720
    %v722 = vsel %vm307, %v718, 0.0
    %723 = vadd.xlane.f32.xlu0 %v722
    %v724 = vpop.xlane.xlu0 %723
    %v725 = vrcp.pop %v721
    %v726 = vrcp.pop %v724
    %v727 = vmul.f32 %v716, %v725
    %v728 = vmul.f32 %v718, %v726
    %v729 = vpack.c.bf16 %v728, %v727
    %731 = vrot.lane.b32.xlu0 %v437, 112
    %v732 = vpop.permute.xlu0 %731
    %v735 = vsel %vm307, %v729, 0
    %737 = vmatpush.bf16.msra.mxu0 0
    %738 = vmatpush.bf16.msra.mxu0 0
    %739 = vmatpush.bf16.msra.mxu0 0
    %740 = vmatpush.bf16.msra.mxu0 0
    %741 = vmatpush.bf16.msra.mxu0 0
    %742 = vmatpush.bf16.msra.mxu0 0
    %743 = vmatpush.bf16.msra.mxu0 0
    %744 = vmatpush.bf16.msra.mxu0 %v732
    %745 = vmatmul.bf16.gmra.mxu0 %v735
    %v746 = vpop.f32.mrf.mxu0
    %v747 = vadd.f32 0.0, %v746
    %v748 = vpop.f32.mrf.mxu0
    %v749 = vadd.f32 0.0, %v748
    %750 = vdwg.mxu0
    %751 = vrot.lane.b32.xlu0 %v305, 80
    %v752 = vpop.permute.xlu0 %751
    %753 = vrot.lane.b32.xlu0 %v306, 80
    %v754 = vpop.permute.xlu0 %753
    %v757 = vsel %vm307, %v752, 0.0
    %758 = vadd.xlane.f32.xlu0 %v757
    %v759 = vpop.xlane.xlu0 %758
    %v760 = vsel %vm307, %v754, 0.0
    %761 = vadd.xlane.f32.xlu0 %v760
    %v762 = vpop.xlane.xlu0 %761
    %v763 = vmul.f32 %v759, %v320
    %v764 = vmul.f32 %v762, %v320
    %v765 = vadd.f32 %v763, 1.1920929e-07
    %v766 = vadd.f32 %v764, 1.1920929e-07
    %v767 = vrsqrt.pop %v765
    %v768 = vmul.f32 %v767, %v765
    %v769 = vmul.f32 %v768, %v767
    %v770 = vmul.f32 0.5, %v769
    %v771 = vsub.f32 1.5, %v770
    %v772 = vmul.f32 %v767, %v771
    %vm773 = vweird.f32 %v765
    %vm774 = vweird.f32 %v767
    %vm775 = vmor %vm773, %vm774
    %v776 = vsel %vm775, %v767, %v772
    %v777 = vrsqrt.pop %v766
    %v778 = vmul.f32 %v777, %v766
    %v779 = vmul.f32 %v778, %v777
    %v780 = vmul.f32 0.5, %v779
    %v781 = vsub.f32 1.5, %v780
    %v782 = vmul.f32 %v777, %v781
    %vm783 = vweird.f32 %v766
    %vm784 = vweird.f32 %v777
    %vm785 = vmor %vm783, %vm784
    %v786 = vsel %vm785, %v777, %v782
    %v787 = vmul.f32 %v776, 0.25
    %v788 = vmul.f32 %v786, 0.25
    %v789 = vmul.f32 %v301, %v787
    %v790 = vmul.f32 %v302, %v788
    %791 = vrot.lane.b32.xlu0 %v305, 16
    %v792 = vpop.permute.xlu0 %791
    %793 = vrot.lane.b32.xlu0 %v306, 16
    %v794 = vpop.permute.xlu0 %793
    %v797 = vsel %vm307, %v792, 0.0
    %798 = vadd.xlane.f32.xlu0 %v797
    %v799 = vpop.xlane.xlu0 %798
    %v800 = vsel %vm307, %v794, 0.0
    %801 = vadd.xlane.f32.xlu0 %v800
    %v802 = vpop.xlane.xlu0 %801
    %v803 = vmul.f32 %v799, %v320
    %v804 = vmul.f32 %v802, %v320
    %v805 = vadd.f32 %v803, 1.1920929e-07
    %v806 = vadd.f32 %v804, 1.1920929e-07
    %v807 = vrsqrt.pop %v805
    %v808 = vmul.f32 %v807, %v805
    %v809 = vmul.f32 %v808, %v807
    %v810 = vmul.f32 0.5, %v809
    %v811 = vsub.f32 1.5, %v810
    %v812 = vmul.f32 %v807, %v811
    %vm813 = vweird.f32 %v805
    %vm814 = vweird.f32 %v807
    %vm815 = vmor %vm813, %vm814
    %v816 = vsel %vm815, %v807, %v812
    %v817 = vrsqrt.pop %v806
    %v818 = vmul.f32 %v817, %v806
    %v819 = vmul.f32 %v818, %v817
    %v820 = vmul.f32 0.5, %v819
    %v821 = vsub.f32 1.5, %v820
    %v822 = vmul.f32 %v817, %v821
    %vm823 = vweird.f32 %v806
    %vm824 = vweird.f32 %v817
    %vm825 = vmor %vm823, %vm824
    %v826 = vsel %vm825, %v817, %v822
    %v827 = vmul.f32 %v301, %v816
    %v828 = vmul.f32 %v302, %v826
    %v829 = vpack.c.bf16 %v790, %v789
    %v830 = vpack.c.bf16 %v828, %v827
    %832 = vrot.lane.b32.xlu0 %v829, 80
    %v833 = vpop.permute.xlu0 %832
    %835 = vrot.lane.b32.xlu0 %v830, 16
    %v836 = vpop.permute.xlu0 %835
    %v838 = vsel %vm307, %v833, 0
    %v841 = vsel %vm307, %v836, 0
    %843 = vmatpush.bf16.xpose.msra.mxu0 0
    %844 = vmatpush.bf16.xpose.msra.mxu0 0
    %845 = vmatpush.bf16.xpose.msra.mxu0 0
    %846 = vmatpush.bf16.xpose.msra.mxu0 0
    %847 = vmatpush.bf16.xpose.msra.mxu0 0
    %848 = vmatpush.bf16.xpose.msra.mxu0 0
    %849 = vmatpush.bf16.xpose.msra.mxu0 0
    %850 = vmatpush.bf16.xpose.msra.mxu0 %v841
    %851 = vmatmul.bf16.gmra.mxu0 %v838
    %v852 = vpop.f32.mrf.mxu0
    %v853 = vadd.f32 %v303, %v852
    %v854 = vpop.f32.mrf.mxu0
    %v855 = vadd.f32 %v304, %v854
    %856 = vdwg.mxu0
    %v857 = vsel %vm307, %v853, -inf
    %858 = vmax.xlane.f32.xlu0 %v857
    %v859 = vpop.xlane.xlu0 %858
    %v860 = vsel %vm307, %v855, -inf
    %861 = vmax.xlane.f32.xlu0 %v860
    %v862 = vpop.xlane.xlu0 %861
    %v863 = vsub.f32 %v853, %v859
    %v864 = vsub.f32 %v855, %v862
    %v865 = vmul.f32 %v863, 1.442695
    %v866 = vpow.pop %v865
    %v867 = vmul.f32 %v864, 1.442695
    %v868 = vpow.pop %v867
    %v869 = vsel %vm307, %v866, 0.0
    %870 = vadd.xlane.f32.xlu0 %v869
    %v871 = vpop.xlane.xlu0 %870
    %v872 = vsel %vm307, %v868, 0.0
    %873 = vadd.xlane.f32.xlu0 %v872
    %v874 = vpop.xlane.xlu0 %873
    %v875 = vrcp.pop %v871
    %v876 = vrcp.pop %v874
    %v877 = vmul.f32 %v866, %v875
    %v878 = vmul.f32 %v868, %v876
    %v879 = vpack.c.bf16 %v878, %v877
    %v881 = vsel %vm307, %v879, 0
    %883 = vmatpush.bf16.msra.mxu0 0
    %884 = vmatpush.bf16.msra.mxu0 0
    %885 = vmatpush.bf16.msra.mxu0 0
    %886 = vmatpush.bf16.msra.mxu0 0
    %887 = vmatpush.bf16.msra.mxu0 0
    %888 = vmatpush.bf16.msra.mxu0 0
    %889 = vmatpush.bf16.msra.mxu0 0
    %890 = vmatpush.bf16.msra.mxu0 %v732
    %891 = vmatmul.bf16.gmra.mxu0 %v881
    %v892 = vpop.f32.mrf.mxu0
    %v893 = vadd.f32 0.0, %v892
    %v894 = vpop.f32.mrf.mxu0
    %v895 = vadd.f32 0.0, %v894
    %896 = vdwg.mxu0
    %899 = vrot.lane.b32.xlu0 %v597, 16
    %v900 = vpop.permute.xlu0 %899
    %901 = vrot.lane.b32.xlu0 %v599, 16
    %v902 = vpop.permute.xlu0 %901
    %907 = vrot.lane.b32.xlu0 %v747, 32
    %v908 = vpop.permute.xlu0 %907
    %909 = vrot.lane.b32.xlu0 %v749, 32
    %v910 = vpop.permute.xlu0 %909
    %915 = vrot.lane.b32.xlu0 %v893, 48
    %v916 = vpop.permute.xlu0 %915
    %917 = vrot.lane.b32.xlu0 %v895, 48
    %v918 = vpop.permute.xlu0 %917
    %v921 = vsel %vm307, %v451, %v900
    %v922 = vsel %vm307, %v453, %v902
    %vm923 = vcmask 261120
    %v924 = vsel %vm923, %v921, %v908
    %v925 = vsel %vm923, %v922, %v910
    %vm926 = vcmask 392192
    %v927 = vsel %vm926, %v924, %v916
    %v928 = vsel %vm926, %v925, %v918
    %v929 = vpack.c.bf16 %v928, %v927
    %v930 = vld [vmem:[%s7] sm:$0xf]
    %v931 = vld [vmem:[%s7 + $0x4] sm:$0xf]
    %v932 = vld [vmem:[%s7 + $0x8] sm:$0xf]
    %v933 = vld [vmem:[%s7 + $0xc] sm:$0xf]
    %v934 = vld [vmem:[%s7 + $0x10] sm:$0xf]
    %v935 = vld [vmem:[%s7 + $0x14] sm:$0xf]
    %v936 = vld [vmem:[%s7 + $0x18] sm:$0xf]
    %v937 = vld [vmem:[%s7 + $0x1c] sm:$0xf]
    %v946 = vunpack.c.l.b16 %v930
    %v947 = vunpack.c.l.b16 %v931
    %v948 = vunpack.c.l.b16 %v932
    %v949 = vunpack.c.l.b16 %v933
    %v950 = vunpack.c.l.b16 %v934
    %v951 = vunpack.c.l.b16 %v935
    %v952 = vunpack.c.l.b16 %v936
    %v953 = vunpack.c.l.b16 %v937
    %v954 = vpack.c.b16 %v947, %v946
    %v955 = vpack.c.b16 %v949, %v948
    %v956 = vpack.c.b16 %v951, %v950
    %v957 = vpack.c.b16 %v953, %v952
    %v963 = vsel %vm147, %v929, 0
    %965 = vmatpush.bf16.msra.mxu0 0
    %966 = vmatpush.bf16.msra.mxu0 0
    %967 = vmatpush.bf16.msra.mxu0 0
    %968 = vmatpush.bf16.msra.mxu0 0
    %969 = vmatpush.bf16.msra.mxu0 %v957
    %970 = vmatpush.bf16.msra.mxu0 %v956
    %971 = vmatpush.bf16.msra.mxu0 %v955
    %972 = vmatpush.bf16.msra.mxu0 %v954
    %973 = vmatmul.bf16.gmra.mxu0 %v963
    %v974 = vpop.f32.mrf.mxu0
    %v975 = vadd.f32 %v143, %v974
    %v976 = vpop.f32.mrf.mxu0
    %v977 = vadd.f32 %v144, %v976
    %978 = vdwg.mxu0
    %v979 = vmul.f32 %v975, %v975
    %v980 = vmul.f32 %v977, %v977
    %v981 = vsel %vm147, %v979, 0.0
    %982 = vadd.xlane.f32.xlu0 %v981
    %v983 = vpop.xlane.xlu0 %982
    %v984 = vsel %vm147, %v980, 0.0
    %985 = vadd.xlane.f32.xlu0 %v984
    %v986 = vpop.xlane.xlu0 %985
    %v987 = vmul.f32 %v983, %v160
    %v988 = vmul.f32 %v986, %v160
    %v989 = vadd.f32 %v987, 1e-05
    %v990 = vadd.f32 %v988, 1e-05
    %v991 = vrsqrt.pop %v989
    %v992 = vmul.f32 %v991, %v989
    %v993 = vmul.f32 %v992, %v991
    %v994 = vmul.f32 0.5, %v993
    %v995 = vsub.f32 1.5, %v994
    %v996 = vmul.f32 %v991, %v995
    %vm997 = vweird.f32 %v989
    %vm998 = vweird.f32 %v991
    %vm999 = vmor %vm997, %vm998
    %v1000 = vsel %vm999, %v991, %v996
    %v1001 = vrsqrt.pop %v990
    %v1002 = vmul.f32 %v1001, %v990
    %v1003 = vmul.f32 %v1002, %v1001
    %v1004 = vmul.f32 0.5, %v1003
    %v1005 = vsub.f32 1.5, %v1004
    %v1006 = vmul.f32 %v1001, %v1005
    %vm1007 = vweird.f32 %v990
    %vm1008 = vweird.f32 %v1001
    %vm1009 = vmor %vm1007, %vm1008
    %v1010 = vsel %vm1009, %v1001, %v1006
    %v1011 = vmul.f32 %v975, %v1000
    %v1012 = vmul.f32 %v977, %v1010
    %v1013 = vld [vmem:[%s2] sm:$0x1]
    %v1015 = vperm.slane %v1013, 0
    %v1017 = vmul.f32 %v1011, %v1015
    %v1018 = vmul.f32 %v1012, %v1015
    %v1019 = vmul.f32 %v1017, %v1017
    %v1020 = vmul.f32 %v1018, %v1018
    %v1021 = vsel %vm147, %v1019, 0.0
    %1022 = vadd.xlane.f32.xlu0 %v1021
    %v1023 = vpop.xlane.xlu0 %1022
    %v1024 = vsel %vm147, %v1020, 0.0
    %1025 = vadd.xlane.f32.xlu0 %v1024
    %v1026 = vpop.xlane.xlu0 %1025
    %v1027 = vmul.f32 %v1023, %v160
    %v1028 = vmul.f32 %v1026, %v160
    %v1029 = vadd.f32 %v1027, 1e-05
    %v1030 = vadd.f32 %v1028, 1e-05
    %v1031 = vrsqrt.pop %v1029
    %v1032 = vmul.f32 %v1031, %v1029
    %v1033 = vmul.f32 %v1032, %v1031
    %v1034 = vmul.f32 0.5, %v1033
    %v1035 = vsub.f32 1.5, %v1034
    %v1036 = vmul.f32 %v1031, %v1035
    %vm1037 = vweird.f32 %v1029
    %vm1038 = vweird.f32 %v1031
    %vm1039 = vmor %vm1037, %vm1038
    %v1040 = vsel %vm1039, %v1031, %v1036
    %v1041 = vrsqrt.pop %v1030
    %v1042 = vmul.f32 %v1041, %v1030
    %v1043 = vmul.f32 %v1042, %v1041
    %v1044 = vmul.f32 0.5, %v1043
    %v1045 = vsub.f32 1.5, %v1044
    %v1046 = vmul.f32 %v1041, %v1045
    %vm1047 = vweird.f32 %v1030
    %vm1048 = vweird.f32 %v1041
    %vm1049 = vmor %vm1047, %vm1048
    %v1050 = vsel %vm1049, %v1041, %v1046
    %v1051 = vmul.f32 %v1017, %v1040
    %v1052 = vmul.f32 %v1018, %v1050
    %v1053 = vld [vmem:[%s3] sm:$0x1]
    %v1055 = vperm.slane %v1053, 0
    %v1057 = vmul.f32 %v1051, %v1055
    %v1058 = vmul.f32 %v1052, %v1055
    %v1059 = vpack.c.bf16 %v1058, %v1057
    %v1060 = vld [vmem:[#allocation5] sm:$0xff]
    %v1061 = vld [vmem:[#allocation5 + $0x8] sm:$0xff]
    %v1062 = vld [vmem:[#allocation5 + $0x10] sm:$0xff]
    %v1063 = vld [vmem:[#allocation5 + $0x18] sm:$0xff]
    %v1064 = vld [vmem:[#allocation5 + $0x20] sm:$0xff]
    %v1065 = vld [vmem:[#allocation5 + $0x28] sm:$0xff]
    %v1066 = vld [vmem:[#allocation5 + $0x30] sm:$0xff]
    %v1067 = vld [vmem:[#allocation5 + $0x38] sm:$0xff]
    %v1076 = vunpack.c.l.b16 %v1060
    %v1077 = vunpack.c.h.b16 %v1060
    %v1078 = vunpack.c.l.b16 %v1061
    %v1079 = vunpack.c.h.b16 %v1061
    %v1080 = vunpack.c.l.b16 %v1062
    %v1081 = vunpack.c.h.b16 %v1062
    %v1082 = vunpack.c.l.b16 %v1063
    %v1083 = vunpack.c.h.b16 %v1063
    %v1084 = vunpack.c.l.b16 %v1064
    %v1085 = vunpack.c.h.b16 %v1064
    %v1086 = vunpack.c.l.b16 %v1065
    %v1087 = vunpack.c.h.b16 %v1065
    %v1088 = vunpack.c.l.b16 %v1066
    %v1089 = vunpack.c.h.b16 %v1066
    %v1090 = vunpack.c.l.b16 %v1067
    %v1091 = vunpack.c.h.b16 %v1067
    %v1092 = vpack.c.b16 %v1078, %v1076
    %v1093 = vpack.c.b16 %v1079, %v1077
    %v1094 = vpack.c.b16 %v1082, %v1080
    %v1095 = vpack.c.b16 %v1083, %v1081
    %v1096 = vpack.c.b16 %v1086, %v1084
    %v1097 = vpack.c.b16 %v1087, %v1085
    %v1098 = vpack.c.b16 %v1090, %v1088
    %v1099 = vpack.c.b16 %v1091, %v1089
    %v1109 = vsel %vm147, %v1059, 0
    %1111 = vmatpush.bf16.msra.mxu0 0
    %1112 = vmatpush.bf16.msra.mxu0 0
    %1113 = vmatpush.bf16.msra.mxu0 0
    %1114 = vmatpush.bf16.msra.mxu0 0
    %1115 = vmatpush.bf16.msra.mxu0 %v1098
    %1116 = vmatpush.bf16.msra.mxu0 %v1096
    %1117 = vmatpush.bf16.msra.mxu0 %v1094
    %1118 = vmatpush.bf16.msra.mxu0 %v1092
    %1119 = vmatmul.bf16.gmra.mxu0 %v1109
    %v1120 = vpop.f32.mrf.mxu0
    %v1121 = vadd.f32 0.0, %v1120
    %v1122 = vpop.f32.mrf.mxu0
    %v1123 = vadd.f32 0.0, %v1122
    %1124 = vdwg.mxu0
    %1125 = vmatpush.bf16.msra.mxu0 0
    %1126 = vmatpush.bf16.msra.mxu0 0
    %1127 = vmatpush.bf16.msra.mxu0 0
    %1128 = vmatpush.bf16.msra.mxu0 0
    %1129 = vmatpush.bf16.msra.mxu0 %v1099
    %1130 = vmatpush.bf16.msra.mxu0 %v1097
    %1131 = vmatpush.bf16.msra.mxu0 %v1095
    %1132 = vmatpush.bf16.msra.mxu0 %v1093
    %1133 = vmatmul.bf16.gmra.mxu0 %v1109
    %v1134 = vpop.f32.mrf.mxu0
    %v1135 = vadd.f32 0.0, %v1134
    %v1136 = vpop.f32.mrf.mxu0
    %v1137 = vadd.f32 0.0, %v1136
    %1138 = vdwg.mxu0
    %v1139 = vxor.u32 %v1121, 2147483648
    %v1140 = vxor.u32 %v1123, 2147483648
    %v1141 = vmul.f32 %v1139, 1.442695
    %v1142 = vpow.pop %v1141
    %v1143 = vmul.f32 %v1140, 1.442695
    %v1144 = vpow.pop %v1143
    %v1145 = vadd.f32 %v1142, 1.0
    %v1146 = vadd.f32 %v1144, 1.0
    %v1147 = vrcp.pop %v1145
    %v1148 = vmul.f32 %v1145, %v1147
    %v1149 = vsub.f32 1.0, %v1148
    %v1150 = vmul.f32 %v1147, %v1149
    %v1151 = vadd.f32 %v1147, %v1150
    %vm1152 = vweird.f32 %v1145
    %vm1153 = vweird.f32 %v1147
    %vm1154 = vmor %vm1152, %vm1153
    %v1155 = vsel %vm1154, %v1147, %v1151
    %v1156 = vand.u32 2147483647, %v1145
    %vm1157 = vcmp.eq.f32.partialorder %v1156, 8.507059e+37
    %v1158 = vand.u32 %v1145, 2147483648
    %v1159 = vor.u32 1.1754944e-38, %v1158
    %v1160 = vsel %vm1157, %v1159, %v1155
    %v1161 = vmul.f32 1.0, %v1160
    %v1162 = vrcp.pop %v1146
    %v1163 = vmul.f32 %v1146, %v1162
    %v1164 = vsub.f32 1.0, %v1163
    %v1165 = vmul.f32 %v1162, %v1164
    %v1166 = vadd.f32 %v1162, %v1165
    %vm1167 = vweird.f32 %v1146
    %vm1168 = vweird.f32 %v1162
    %vm1169 = vmor %vm1167, %vm1168
    %v1170 = vsel %vm1169, %v1162, %v1166
    %v1171 = vand.u32 2147483647, %v1146
    %vm1172 = vcmp.eq.f32.partialorder %v1171, 8.507059e+37
    %v1173 = vand.u32 %v1146, 2147483648
    %v1174 = vor.u32 1.1754944e-38, %v1173
    %v1175 = vsel %vm1172, %v1174, %v1170
    %v1176 = vmul.f32 1.0, %v1175
    %v1177 = vmul.f32 %v1121, %v1161
    %v1178 = vmul.f32 %v1123, %v1176
    %v1179 = vmul.f32 %v1177, %v1135
    %v1180 = vmul.f32 %v1178, %v1137
    %v1181 = vpack.c.bf16 %v1180, %v1179
    %v1182 = vld [vmem:[%s9] sm:$0xf]
    %v1183 = vld [vmem:[%s9 + $0x4] sm:$0xf]
    %v1184 = vld [vmem:[%s9 + $0x8] sm:$0xf]
    %v1185 = vld [vmem:[%s9 + $0xc] sm:$0xf]
    %v1186 = vld [vmem:[%s9 + $0x10] sm:$0xf]
    %v1187 = vld [vmem:[%s9 + $0x14] sm:$0xf]
    %v1188 = vld [vmem:[%s9 + $0x18] sm:$0xf]
    %v1189 = vld [vmem:[%s9 + $0x1c] sm:$0xf]
    %v1190 = vld [vmem:[%s9 + $0x20] sm:$0xf]
    %v1191 = vld [vmem:[%s9 + $0x24] sm:$0xf]
    %v1192 = vld [vmem:[%s9 + $0x28] sm:$0xf]
    %v1193 = vld [vmem:[%s9 + $0x2c] sm:$0xf]
    %v1194 = vld [vmem:[%s9 + $0x30] sm:$0xf]
    %v1195 = vld [vmem:[%s9 + $0x34] sm:$0xf]
    %v1196 = vld [vmem:[%s9 + $0x38] sm:$0xf]
    %v1197 = vld [vmem:[%s9 + $0x3c] sm:$0xf]
    %v1214 = vunpack.c.l.b16 %v1182
    %v1215 = vunpack.c.l.b16 %v1183
    %v1216 = vunpack.c.l.b16 %v1184
    %v1217 = vunpack.c.l.b16 %v1185
    %v1218 = vunpack.c.l.b16 %v1186
    %v1219 = vunpack.c.l.b16 %v1187
    %v1220 = vunpack.c.l.b16 %v1188
    %v1221 = vunpack.c.l.b16 %v1189
    %v1222 = vunpack.c.l.b16 %v1190
    %v1223 = vunpack.c.l.b16 %v1191
    %v1224 = vunpack.c.l.b16 %v1192
    %v1225 = vunpack.c.l.b16 %v1193
    %v1226 = vunpack.c.l.b16 %v1194
    %v1227 = vunpack.c.l.b16 %v1195
    %v1228 = vunpack.c.l.b16 %v1196
    %v1229 = vunpack.c.l.b16 %v1197
    %v1230 = vpack.c.b16 %v1215, %v1214
    %v1231 = vpack.c.b16 %v1217, %v1216
    %v1232 = vpack.c.b16 %v1219, %v1218
    %v1233 = vpack.c.b16 %v1221, %v1220
    %v1234 = vpack.c.b16 %v1223, %v1222
    %v1235 = vpack.c.b16 %v1225, %v1224
    %v1236 = vpack.c.b16 %v1227, %v1226
    %v1237 = vpack.c.b16 %v1229, %v1228
    %1246 = vmatpush.bf16.msra.mxu0 %v1237
    %1247 = vmatpush.bf16.msra.mxu0 %v1236
    %1248 = vmatpush.bf16.msra.mxu0 %v1235
    %1249 = vmatpush.bf16.msra.mxu0 %v1234
    %1250 = vmatpush.bf16.msra.mxu0 %v1233
    %1251 = vmatpush.bf16.msra.mxu0 %v1232
    %1252 = vmatpush.bf16.msra.mxu0 %v1231
    %1253 = vmatpush.bf16.msra.mxu0 %v1230
    %1254 = vmatmul.bf16.gmra.mxu0 %v1181
    %v1255 = vpop.f32.mrf.mxu0
    %v1256 = vadd.f32 %v1017, %v1255
    %v1257 = vpop.f32.mrf.mxu0
    %v1258 = vadd.f32 %v1018, %v1257
    %1259 = vdwg.mxu0
    %v1260 = vmul.f32 %v1256, %v1256
    %v1261 = vmul.f32 %v1258, %v1258
    %v1262 = vsel %vm147, %v1260, 0.0
    %1263 = vadd.xlane.f32.xlu0 %v1262
    %v1264 = vpop.xlane.xlu0 %1263
    %v1265 = vsel %vm147, %v1261, 0.0
    %1266 = vadd.xlane.f32.xlu0 %v1265
    %v1267 = vpop.xlane.xlu0 %1266
    %v1268 = vmul.f32 %v1264, %v160
    %v1269 = vmul.f32 %v1267, %v160
    %v1270 = vadd.f32 %v1268, 1e-05
    %v1271 = vadd.f32 %v1269, 1e-05
    %v1272 = vrsqrt.pop %v1270
    %v1273 = vmul.f32 %v1272, %v1270
    %v1274 = vmul.f32 %v1273, %v1272
    %v1275 = vmul.f32 0.5, %v1274
    %v1276 = vsub.f32 1.5, %v1275
    %v1277 = vmul.f32 %v1272, %v1276
    %vm1278 = vweird.f32 %v1270
    %vm1279 = vweird.f32 %v1272
    %vm1280 = vmor %vm1278, %vm1279
    %v1281 = vsel %vm1280, %v1272, %v1277
    %v1282 = vrsqrt.pop %v1271
    %v1283 = vmul.f32 %v1282, %v1271
    %v1284 = vmul.f32 %v1283, %v1282
    %v1285 = vmul.f32 0.5, %v1284
    %v1286 = vsub.f32 1.5, %v1285
    %v1287 = vmul.f32 %v1282, %v1286
    %vm1288 = vweird.f32 %v1271
    %vm1289 = vweird.f32 %v1282
    %vm1290 = vmor %vm1288, %vm1289
    %v1291 = vsel %vm1290, %v1282, %v1287
    %v1292 = vmul.f32 %v1256, %v1281
    %v1293 = vmul.f32 %v1258, %v1291
    %v1294 = vld [vmem:[%s4] sm:$0x1]
    %v1296 = vperm.slane %v1294, 0
    %v1298 = vmul.f32 %v1292, %v1296
    %v1299 = vmul.f32 %v1293, %v1296
    %1300 = vst.msk [vmem:[#allocation13] sm:$0xff] %vm147, %v1298
    %1301 = vst.msk [vmem:[#allocation13 + $0x8] sm:$0xff] %vm147, %v1299
    // Predicated region
    $region82: #{sandwich_forward.1} parent=1 // pred_check
      _
    $region83: #{sandwich_forward.1} parent=1 // pred_check_branch
      %1303 = sbr.rel (0) target = $region85
    $region84: #{sandwich_forward.1} parent=1 // pred_region
      %1305 = vsyncadd [#allocation4], 0
      %s1306 = sshll.u32 [#allocation13], 4
      %s1307 = int_to_ptr.vmem [resolvable:$true] %s1306
      %s1308 = sshll.u32 %s14, 4
      %s1309 = int_to_ptr.hbm [resolvable:$true] %s1308
      %1314 = dma.vmem_to_hbm [thread:$0]  %s1307, 256, %s1309, [#allocation4], 128, 128, 8
    $region85: #{sandwich_forward.1} parent=1 // pred_fallthru
      _
    // Predicated region
    $region86: #{sandwich_forward.1} parent=1 // pred_check
      _
    $region87: #{sandwich_forward.1} parent=1 // pred_check_branch
      %1316 = sbr.rel (0) target = $region89
    $region88: #{sandwich_forward.1} parent=1 // pred_region
      %1318 = dma.done [#allocation4], 256
    $region89: #{sandwich_forward.1} parent=1 // pred_fallthru
      _
    %1319 = vsyncpa [#allocation3], 1
    %1320 = vsyncpa [#allocation6], 1
    %1321 = vsyncpa [#allocation9], 1
    %1322 = vsyncpa [#allocation12], 1
    %1323 = vsyncpa [#allocation4], 1

</llo_original>
